<compile_context>
chip_gen: v7x
topology: tpu7x:2x2x1
jax: 0.10.0
libtpu: 0.0.40
codegen_flags: <defaults>
</compile_context>

<pallas_src>
import jax
import jax.numpy as jnp
from jax.experimental import pallas as pl
from jax.experimental.pallas import tpu as pltpu

LANE = 128       # TPU vreg lane width; every feature dim is zero-padded to this.
TILE_MAX = 256   # batch rows per grid step; safe for v7x's 64 MiB VMEM.
                 # TODO(synk): sweep 256->1024 on v5e/v6e (128 MiB VMEM headroom).


def _round_up(x, m):
    return (x + m - 1) // m * m


# ---------------------------------------------------------------------------
# Fused kernel: q(s) -> z -> p_t([z,a]) -> n_z -> p_o(n_z), p_r(n_z) -> out
# ---------------------------------------------------------------------------
def _make_fused_kernel(n_hidden: int, lane: int, tile: int, n_split: int):
    tbs = tile // n_split  # rows per in-kernel sub-block

    def kernel(s_ref, a_ref, eq_ref, et_ref, eo_ref, er_ref,
               w_ref, b_ref, out_ref, pad_scr):
        # Static counters: kernel consumes weight/bias blocks in exactly the
        # order pack_dynamics_params() stored them.
        widx = [0]
        bidx = [0]

        def W():
            w = w_ref[widx[0]]          # (lane, lane) bf16
            widx[0] += 1
            return w

        def Bv():
            b = b_ref[bidx[0]]          # (1, lane) f32
            bidx[0] += 1
            return b

        def pad_split(ref, to_bf16):
            """Zero-pad a narrow (tile, w) input to (tile, lane) via the VMEM
            scratch and split it into n_split row sub-blocks."""
            w = ref.shape[-1]
            pad_scr[...] = jnp.zeros_like(pad_scr)
            pad_scr[:, :w] = ref[...]
            full = pad_scr[...]
            if to_bf16:
                full = full.astype(jnp.bfloat16)
            return [full[k * tbs:(k + 1) * tbs] for k in range(n_split)]

        def mxu(x, w):
            # bf16 x bf16 -> f32 accumulate (single-pass MXU on v5e/v6e/v7x).
            return jnp.dot(x, w, preferred_element_type=jnp.float32)

        def dense_tanh(hs, w, b):
            # Independent sub-blocks -> the scheduler interleaves their
            # MXU / VPU / EUP work.
            return [jnp.tanh(mxu(h, w) + b).astype(jnp.bfloat16) for h in hs]

        def dense2_tanh(hs, gs, w1, w2, b):
            return [jnp.tanh(mxu(h, w1) + mxu(g, w2) + b).astype(jnp.bfloat16)
                    for h, g in zip(hs, gs)]

        def sample_head(hs, eps, to_bf16):
            # Reference MLP applies tanh after the last layer as well.
            w_mu, b_mu, w_lv, b_lv = W(), Bv(), W(), Bv()
            outs = []
            for h, e in zip(hs, eps):
                mu = jnp.tanh(mxu(h, w_mu) + b_mu)
                lv = jnp.tanh(mxu(h, w_lv) + b_lv)
                # covariance = diag(exp(0.5*lv)) => stddev = exp(0.25*lv)
                smp = mu + jnp.exp(0.25 * lv) * e
                outs.append(smp.astype(jnp.bfloat16) if to_bf16 else smp)
            return outs

        # ---- z = q(s).rsample() -------------------------------------------
        hs = pad_split(s_ref, True)
        for _ in range(n_hidden):
            hs = dense_tanh(hs, W(), Bv())
        zs = sample_head(hs, pad_split(eq_ref, False), True)

        # ---- n_z = p_t(cat(z, a)).rsample() (concat folded into split W0) --
        a_s = pad_split(a_ref, True)
        hs = dense2_tanh(zs, a_s, W(), W(), Bv())
        for _ in range(n_hidden - 1):
            hs = dense_tanh(hs, W(), Bv())
        nzs = sample_head(hs, pad_split(et_ref, False), True)

        # ---- n_s = p_o(n_z).rsample() (independent 128-wide chain) ---------
        hs = nzs
        for _ in range(n_hidden):
            hs = dense_tanh(hs, W(), Bv())
        ns = sample_head(hs, pad_split(eo_ref, False), False)

        # ---- n_r = p_r(n_z).rsample() (independent 128-wide chain) ---------
        hs = nzs
        for _ in range(n_hidden):
            hs = dense_tanh(hs, W(), Bv())
        nr = sample_head(hs, pad_split(er_ref, False), False)

        # Lane-dense output slab: n_s in lanes [0,128), n_r in [128,256).
        for k in range(n_split):
            out_ref[k * tbs:(k + 1) * tbs, 0:lane] = ns[k]
            out_ref[k * tbs:(k + 1) * tbs, lane:2 * lane] = nr[k]

    return kernel


# ---------------------------------------------------------------------------
# Forward wrapper: single pallas_call, batch-tiled grid, resident weights.
# ---------------------------------------------------------------------------
@jax.jit
def dynamics_forward(w_slab, b_slab, s, a, eps_q, eps_t, eps_o, eps_r):
    lane = LANE
    batch, state_dim = s.shape
    n_hidden = (w_slab.shape[0] - 9) // 4   # NW = 4*H + 9

    tile = min(TILE_MAX, _round_up(batch, 8))
    b_pad = _round_up(batch, tile)
    n_split = 2 if (tile % 16 == 0) else 1  # 2-way sub-block interleave

    def padb(x):  # pad batch to a tile multiple (avoids ragged masked tiles)
        return x if x.shape[0] == b_pad else jnp.pad(
            x, ((0, b_pad - x.shape[0]), (0, 0)))

    s_p, a_p, eq, et, eo, er = map(padb, (s, a, eps_q, eps_t, eps_o, eps_r))

    row = lambda i: (i, 0)
    const3 = lambda i: (0, 0, 0)

    out = pl.pallas_call(
        _make_fused_kernel(n_hidden, lane, tile, n_split),
        out_shape=jax.ShapeDtypeStruct((b_pad, 2 * lane), jnp.float32),
        grid_spec=pltpu.PrefetchScalarGridSpec(
            num_scalar_prefetch=0,
            grid=(b_pad // tile,),
            in_specs=[
                pl.BlockSpec((tile, s.shape[1]), row),        # s   (unpadded)
                pl.BlockSpec((tile, a.shape[1]), row),        # a
                pl.BlockSpec((tile, eps_q.shape[1]), row),    # eps_q
                pl.BlockSpec((tile, eps_t.shape[1]), row),    # eps_t
                pl.BlockSpec((tile, eps_o.shape[1]), row),    # eps_o
                pl.BlockSpec((tile, eps_r.shape[1]), row),    # eps_r
                pl.BlockSpec(w_slab.shape, const3),           # weights: resident
                pl.BlockSpec(b_slab.shape, const3),           # biases:  resident
            ],
            out_specs=pl.BlockSpec((tile, 2 * lane), row),
            scratch_shapes=[pltpu.VMEM((tile, lane), jnp.float32)],
        ),
        compiler_params=pltpu.CompilerParams(
            dimension_semantics=("parallel",)),
    )(s_p, a_p, eq, et, eo, er, w_slab, b_slab)

    n_s = out[:batch, :state_dim]
    n_r = out[:batch, lane:lane + 1]
    return n_s, n_r


# ---------------------------------------------------------------------------
# Parameter initialization (Xavier-uniform weights, zero bias — as in PyTorch)
# Weights are stored as (in, out), i.e. PyTorch Linear.weight transposed.
# ---------------------------------------------------------------------------
def init_mlp(key, layer_dims):
    params = []
    for i in range(len(layer_dims) - 1):
        fan_in, fan_out = layer_dims[i], layer_dims[i + 1]
        key, sub = jax.random.split(key)
        limit = (6.0 / (fan_in + fan_out)) ** 0.5
        w = jax.random.uniform(sub, (fan_in, fan_out), jnp.float32,
                               minval=-limit, maxval=limit)
        b = jnp.zeros((fan_out,), jnp.float32)
        params.append((w, b))
    return key, params


def init_dynamics_model(key, state_dim, action_dim, latent_dim, hidden_dim):
    key, q = init_mlp(key, [state_dim] + hidden_dim + [latent_dim * 2])
    key, p_t = init_mlp(key, [latent_dim + action_dim] + hidden_dim + [latent_dim * 2])
    key, p_o = init_mlp(key, [latent_dim] + hidden_dim + [state_dim * 2])
    key, p_r = init_mlp(key, [latent_dim] + hidden_dim + [1 * 2])
    return {"q": q, "p_t": p_t, "p_o": p_o, "p_r": p_r}


# ---------------------------------------------------------------------------
# Pack raw f32 params into two contiguous slabs:
#   w_slab: (NW, 128, 128) bf16  (NW = 4*H + 9)
#   b_slab: (NB, 1,   128) f32   (NB = 4*H + 8)
# Order == kernel consumption order.  Zero padding is exact (tanh(0) == 0).
# ---------------------------------------------------------------------------
def pack_dynamics_params(raw, state_dim, action_dim, latent_dim, hidden_dim,
                         lane=LANE):
    n_hidden = len(hidden_dim)
    assert n_hidden >= 1
    for d in [state_dim, action_dim, latent_dim, 1] + list(hidden_dim):
        assert d <= lane, "feature dims must fit in one 128-lane block"

    ws, bs = [], []

    def add_w(w):
        blk = jnp.zeros((lane, lane), jnp.bfloat16)
        ws.append(blk.at[:w.shape[0], :w.shape[1]].set(w.astype(jnp.bfloat16)))

    def add_b(b):
        bs.append(jnp.zeros((1, lane), jnp.float32).at[0, :b.shape[0]].set(b))

    def add_plain(net, i):
        w, b = raw[net][i]
        add_w(w); add_b(b)

    def add_head(net, out_dim):
        w, b = raw[net][n_hidden]
        add_w(w[:, :out_dim]); add_b(b[:out_dim])    # W_mu, b_mu
        add_w(w[:, out_dim:]); add_b(b[out_dim:])    # W_logvar, b_logvar

    # q
    for i in range(n_hidden):
        add_plain("q", i)
    add_head("q", latent_dim)
    # p_t (first layer split over [z | a])
    w0, b0 = raw["p_t"][0]
    add_w(w0[:latent_dim]); add_w(w0[latent_dim:]); add_b(b0)
    for i in range(1, n_hidden):
        add_plain("p_t", i)
    add_head("p_t", latent_dim)
    # p_o
    for i in range(n_hidden):
        add_plain("p_o", i)
    add_head("p_o", state_dim)
    # p_r
    for i in range(n_hidden):
        add_plain("p_r", i)
    add_head("p_r", 1)

    return jnp.stack(ws), jnp.stack(bs)


# ---------------------------------------------------------------------------
# Pure-JAX reference (same bf16 matmul precision) for a numerical sanity check
# ---------------------------------------------------------------------------
def _ref_mlp(params, x):
    for w, b in params:
        x = jnp.tanh(jnp.dot(x.astype(jnp.bfloat16), w.astype(jnp.bfloat16),
                             preferred_element_type=jnp.float32) + b)
    return x


def _ref_pnn_sample(params, x, eps):
    h = _ref_mlp(params, x)
    d = eps.shape[-1]
    mu, log_var = h[:, :d], h[:, d:]
    return mu + jnp.exp(0.25 * log_var) * eps


def dynamics_forward_ref(raw, s, a, eps_q, eps_t, eps_o, eps_r):
    z = _ref_pnn_sample(raw["q"], s, eps_q)
    n_z = _ref_pnn_sample(raw["p_t"], jnp.concatenate([z, a], axis=-1), eps_t)
    n_s = _ref_pnn_sample(raw["p_o"], n_z, eps_o)
    n_r = _ref_pnn_sample(raw["p_r"], n_z, eps_r)
    return n_s, n_r


if __name__ == "__main__":
    batch = 8
    state_dim = 16
    action_dim = 4
    latent_dim = 8
    hidden_dim = [32, 32]

    key = jax.random.PRNGKey(0)
    raw = init_dynamics_model(key, state_dim, action_dim, latent_dim, hidden_dim)
    w_slab, b_slab = pack_dynamics_params(raw, state_dim, action_dim,
                                          latent_dim, hidden_dim)

    k1, k2, k3, k4, k5, k6 = jax.random.split(jax.random.PRNGKey(0), 6)
    s = jax.random.normal(k1, (batch, state_dim), jnp.float32)
    a = jax.random.normal(k2, (batch, action_dim), jnp.float32)
    # deterministic reparameterization noise, one array per rsample call
    eps_q = jax.random.normal(k3, (batch, latent_dim), jnp.float32)
    eps_t = jax.random.normal(k4, (batch, latent_dim), jnp.float32)
    eps_o = jax.random.normal(k5, (batch, state_dim), jnp.float32)
    eps_r = jax.random.normal(k6, (batch, 1), jnp.float32)

    n_s, n_r = dynamics_forward(w_slab, b_slab, s, a, eps_q, eps_t, eps_o, eps_r)
    jax.block_until_ready((n_s, n_r))

    assert n_s.shape == (batch, state_dim) and n_s.dtype == jnp.float32
    assert n_r.shape == (batch, 1) and n_r.dtype == jnp.float32
    assert bool(jnp.all(jnp.isfinite(n_s))) and bool(jnp.all(jnp.isfinite(n_r)))

    ref_s, ref_r = dynamics_forward_ref(raw, s, a, eps_q, eps_t, eps_o, eps_r)
    assert bool(jnp.max(jnp.abs(n_s - ref_s)) < 3e-2)
    assert bool(jnp.max(jnp.abs(n_r - ref_r)) < 3e-2)

    # Larger batch: exercises the multi-step batch grid, batch padding to the
    # tile, the 2-way in-kernel sub-block interleave, and resident weights.
    big = 640
    kb = jax.random.split(jax.random.PRNGKey(1), 6)
    sb = jax.random.normal(kb[0], (big, state_dim), jnp.float32)
    ab = jax.random.normal(kb[1], (big, action_dim), jnp.float32)
    eqb = jax.random.normal(kb[2], (big, latent_dim), jnp.float32)
    etb = jax.random.normal(kb[3], (big, latent_dim), jnp.float32)
    eob = jax.random.normal(kb[4], (big, state_dim), jnp.float32)
    erb = jax.random.normal(kb[5], (big, 1), jnp.float32)
    ns_b, nr_b = dynamics_forward(w_slab, b_slab, sb, ab, eqb, etb, eob, erb)
    jax.block_until_ready((ns_b, nr_b))
    ref_sb, ref_rb = dynamics_forward_ref(raw, sb, ab, eqb, etb, eob, erb)
    assert ns_b.shape == (big, state_dim) and nr_b.shape == (big, 1)
    assert bool(jnp.max(jnp.abs(ns_b - ref_sb)) < 3e-2)
    assert bool(jnp.max(jnp.abs(nr_b - ref_rb)) < 3e-2)

    print("KERNEL_OK")
</pallas_src>

<mosaic_0001>
module attributes {stable_mosaic.version = 11 : i64} {
  func.func @kernel(%arg0: i32, %arg1: memref<8x16xf32, #tpu.memory_space<vmem>>, %arg2: memref<8x4xf32, #tpu.memory_space<vmem>>, %arg3: memref<8x8xf32, #tpu.memory_space<vmem>>, %arg4: memref<8x8xf32, #tpu.memory_space<vmem>>, %arg5: memref<8x16xf32, #tpu.memory_space<vmem>>, %arg6: memref<8x1xf32, #tpu.memory_space<vmem>>, %arg7: memref<17x128x128xbf16, #tpu.memory_space<vmem>>, %arg8: memref<16x1x128xf32, #tpu.memory_space<vmem>>, %arg9: memref<8x256xf32, #tpu.memory_space<vmem>>, %arg10: memref<8x128xf32, #tpu.memory_space<vmem>>) attributes {dimension_semantics = [#tpu.dimension_semantics<parallel>], iteration_bounds = array<i64: 1>, scalar_prefetch = 0 : i64, scratch_operands = 1 : i64, tpu.core_type = #tpu.core_type<tc>, window_params = [{transform_indices = @transform_0, window_bounds = array<i64: 8, 16>}, {transform_indices = @transform_1, window_bounds = array<i64: 8, 4>}, {transform_indices = @transform_2, window_bounds = array<i64: 8, 8>}, {transform_indices = @transform_3, window_bounds = array<i64: 8, 8>}, {transform_indices = @transform_4, window_bounds = array<i64: 8, 16>}, {transform_indices = @transform_5, window_bounds = array<i64: 8, 1>}, {pipeline_mode = #tpu.pipeline_mode<synchronous>, transform_indices = @transform_6, window_bounds = array<i64: 17, 128, 128>}, {pipeline_mode = #tpu.pipeline_mode<synchronous>, transform_indices = @transform_7, window_bounds = array<i64: 16, 1, 128>}, {transform_indices = @transform_8, window_bounds = array<i64: 8, 256>}]} {
    %cst = arith.constant 0.000000e+00 : f32
    %0 = vector.broadcast %cst : f32 to vector<8x128xf32>
    %c0 = arith.constant 0 : index
    %c0_0 = arith.constant 0 : index
    %1 = vector.load %arg10[%c0, %c0_0] : memref<8x128xf32, #tpu.memory_space<vmem>>, vector<8x128xf32>
    tpu.vector_store %arg10[%c0, %c0_0], %0 {strides = array<i32>} : memref<8x128xf32, #tpu.memory_space<vmem>>, vector<8x128xf32>,
    %c0_1 = arith.constant 0 : index
    %c0_2 = arith.constant 0 : index
    %2 = vector.load %arg1[%c0_1, %c0_2] : memref<8x16xf32, #tpu.memory_space<vmem>>, vector<8x16xf32>
    %c0_3 = arith.constant 0 : index
    %c0_4 = arith.constant 0 : index
    %3 = vector.load %arg10[%c0_3, %c0_4] : memref<8x128xf32, #tpu.memory_space<vmem>>, vector<8x16xf32>
    tpu.vector_store %arg10[%c0_3, %c0_4], %2 {strides = array<i32>} : memref<8x128xf32, #tpu.memory_space<vmem>>, vector<8x16xf32>,
    %c0_5 = arith.constant 0 : index
    %c0_6 = arith.constant 0 : index
    %4 = vector.load %arg10[%c0_5, %c0_6] : memref<8x128xf32, #tpu.memory_space<vmem>>, vector<8x128xf32>
    %5 = arith.truncf %4 : vector<8x128xf32> to vector<8x128xbf16>
    %c0_7 = arith.constant 0 : index
    %c0_8 = arith.constant 0 : index
    %c0_9 = arith.constant 0 : index
    %6 = vector.load %arg7[%c0_7, %c0_8, %c0_9] : memref<17x128x128xbf16, #tpu.memory_space<vmem>>, vector<1x128x128xbf16>
    %7 = vector.shape_cast %6 : vector<1x128x128xbf16> to vector<128x128xbf16>
    %c0_10 = arith.constant 0 : index
    %c0_11 = arith.constant 0 : index
    %c0_12 = arith.constant 0 : index
    %8 = vector.load %arg8[%c0_10, %c0_11, %c0_12] : memref<16x1x128xf32, #tpu.memory_space<vmem>>, vector<1x1x128xf32>
    %9 = vector.shape_cast %8 : vector<1x1x128xf32> to vector<1x128xf32>
    %cst_13 = arith.constant dense<0.000000e+00> : vector<8x128xf32>
    %10 = tpu.matmul %5, %7, %cst_13 {dimension_numbers = #tpu.dot_dimension_numbers<[1], [0], [0], [1], [0, 0, 1, 1], [], []>} : vector<8x128xbf16>, vector<128x128xbf16>, vector<8x128xf32> -> vector<8x128xf32>
    %11 = vector.broadcast %9 : vector<1x128xf32> to vector<8x128xf32>
    %12 = arith.addf %10, %11 : vector<8x128xf32>
    %13 = math.tanh %12 : vector<8x128xf32>
    %14 = arith.truncf %13 : vector<8x128xf32> to vector<8x128xbf16>
    %c1 = arith.constant 1 : index
    %c0_14 = arith.constant 0 : index
    %c0_15 = arith.constant 0 : index
    %15 = vector.load %arg7[%c1, %c0_14, %c0_15] : memref<17x128x128xbf16, #tpu.memory_space<vmem>>, vector<1x128x128xbf16>
    %16 = vector.shape_cast %15 : vector<1x128x128xbf16> to vector<128x128xbf16>
    %c1_16 = arith.constant 1 : index
    %c0_17 = arith.constant 0 : index
    %c0_18 = arith.constant 0 : index
    %17 = vector.load %arg8[%c1_16, %c0_17, %c0_18] : memref<16x1x128xf32, #tpu.memory_space<vmem>>, vector<1x1x128xf32>
    %18 = vector.shape_cast %17 : vector<1x1x128xf32> to vector<1x128xf32>
    %cst_19 = arith.constant dense<0.000000e+00> : vector<8x128xf32>
    %19 = tpu.matmul %14, %16, %cst_19 {dimension_numbers = #tpu.dot_dimension_numbers<[1], [0], [0], [1], [0, 0, 1, 1], [], []>} : vector<8x128xbf16>, vector<128x128xbf16>, vector<8x128xf32> -> vector<8x128xf32>
    %20 = vector.broadcast %18 : vector<1x128xf32> to vector<8x128xf32>
    %21 = arith.addf %19, %20 : vector<8x128xf32>
    %22 = math.tanh %21 : vector<8x128xf32>
    %23 = arith.truncf %22 : vector<8x128xf32> to vector<8x128xbf16>
    %cst_20 = arith.constant 0.000000e+00 : f32
    %24 = vector.broadcast %cst_20 : f32 to vector<8x128xf32>
    %c0_21 = arith.constant 0 : index
    %c0_22 = arith.constant 0 : index
    %25 = vector.load %arg10[%c0_21, %c0_22] : memref<8x128xf32, #tpu.memory_space<vmem>>, vector<8x128xf32>
    tpu.vector_store %arg10[%c0_21, %c0_22], %24 {strides = array<i32>} : memref<8x128xf32, #tpu.memory_space<vmem>>, vector<8x128xf32>,
    %c0_23 = arith.constant 0 : index
    %c0_24 = arith.constant 0 : index
    %26 = vector.load %arg3[%c0_23, %c0_24] : memref<8x8xf32, #tpu.memory_space<vmem>>, vector<8x8xf32>
    %c0_25 = arith.constant 0 : index
    %c0_26 = arith.constant 0 : index
    %27 = vector.load %arg10[%c0_25, %c0_26] : memref<8x128xf32, #tpu.memory_space<vmem>>, vector<8x8xf32>
    tpu.vector_store %arg10[%c0_25, %c0_26], %26 {strides = array<i32>} : memref<8x128xf32, #tpu.memory_space<vmem>>, vector<8x8xf32>,
    %c0_27 = arith.constant 0 : index
    %c0_28 = arith.constant 0 : index
    %28 = vector.load %arg10[%c0_27, %c0_28] : memref<8x128xf32, #tpu.memory_space<vmem>>, vector<8x128xf32>
    %c2 = arith.constant 2 : index
    %c0_29 = arith.constant 0 : index
    %c0_30 = arith.constant 0 : index
    %29 = vector.load %arg7[%c2, %c0_29, %c0_30] : memref<17x128x128xbf16, #tpu.memory_space<vmem>>, vector<1x128x128xbf16>
    %30 = vector.shape_cast %29 : vector<1x128x128xbf16> to vector<128x128xbf16>
    %c2_31 = arith.constant 2 : index
    %c0_32 = arith.constant 0 : index
    %c0_33 = arith.constant 0 : index
    %31 = vector.load %arg8[%c2_31, %c0_32, %c0_33] : memref<16x1x128xf32, #tpu.memory_space<vmem>>, vector<1x1x128xf32>
    %32 = vector.shape_cast %31 : vector<1x1x128xf32> to vector<1x128xf32>
    %c3 = arith.constant 3 : index
    %c0_34 = arith.constant 0 : index
    %c0_35 = arith.constant 0 : index
    %33 = vector.load %arg7[%c3, %c0_34, %c0_35] : memref<17x128x128xbf16, #tpu.memory_space<vmem>>, vector<1x128x128xbf16>
    %34 = vector.shape_cast %33 : vector<1x128x128xbf16> to vector<128x128xbf16>
    %c3_36 = arith.constant 3 : index
    %c0_37 = arith.constant 0 : index
    %c0_38 = arith.constant 0 : index
    %35 = vector.load %arg8[%c3_36, %c0_37, %c0_38] : memref<16x1x128xf32, #tpu.memory_space<vmem>>, vector<1x1x128xf32>
    %36 = vector.shape_cast %35 : vector<1x1x128xf32> to vector<1x128xf32>
    %cst_39 = arith.constant dense<0.000000e+00> : vector<8x128xf32>
    %37 = tpu.matmul %23, %30, %cst_39 {dimension_numbers = #tpu.dot_dimension_numbers<[1], [0], [0], [1], [0, 0, 1, 1], [], []>} : vector<8x128xbf16>, vector<128x128xbf16>, vector<8x128xf32> -> vector<8x128xf32>
    %38 = vector.broadcast %32 : vector<1x128xf32> to vector<8x128xf32>
    %39 = arith.addf %37, %38 : vector<8x128xf32>
    %40 = math.tanh %39 : vector<8x128xf32>
    %cst_40 = arith.constant dense<0.000000e+00> : vector<8x128xf32>
    %41 = tpu.matmul %23, %34, %cst_40 {dimension_numbers = #tpu.dot_dimension_numbers<[1], [0], [0], [1], [0, 0, 1, 1], [], []>} : vector<8x128xbf16>, vector<128x128xbf16>, vector<8x128xf32> -> vector<8x128xf32>
    %42 = vector.broadcast %36 : vector<1x128xf32> to vector<8x128xf32>
    %43 = arith.addf %41, %42 : vector<8x128xf32>
    %44 = math.tanh %43 : vector<8x128xf32>
    %cst_41 = arith.constant 2.500000e-01 : f32
    %45 = vector.broadcast %cst_41 : f32 to vector<8x128xf32>
    %46 = arith.mulf %45, %44 : vector<8x128xf32>
    %47 = math.exp %46 : vector<8x128xf32>
    %48 = arith.mulf %47, %28 : vector<8x128xf32>
    %49 = arith.addf %40, %48 : vector<8x128xf32>
    %50 = arith.truncf %49 : vector<8x128xf32> to vector<8x128xbf16>
    %cst_42 = arith.constant 0.000000e+00 : f32
    %51 = vector.broadcast %cst_42 : f32 to vector<8x128xf32>
    %c0_43 = arith.constant 0 : index
    %c0_44 = arith.constant 0 : index
    %52 = vector.load %arg10[%c0_43, %c0_44] : memref<8x128xf32, #tpu.memory_space<vmem>>, vector<8x128xf32>
    tpu.vector_store %arg10[%c0_43, %c0_44], %51 {strides = array<i32>} : memref<8x128xf32, #tpu.memory_space<vmem>>, vector<8x128xf32>,
    %c0_45 = arith.constant 0 : index
    %c0_46 = arith.constant 0 : index
    %53 = vector.load %arg2[%c0_45, %c0_46] : memref<8x4xf32, #tpu.memory_space<vmem>>, vector<8x4xf32>
    %c0_47 = arith.constant 0 : index
    %c0_48 = arith.constant 0 : index
    %54 = vector.load %arg10[%c0_47, %c0_48] : memref<8x128xf32, #tpu.memory_space<vmem>>, vector<8x4xf32>
    tpu.vector_store %arg10[%c0_47, %c0_48], %53 {strides = array<i32>} : memref<8x128xf32, #tpu.memory_space<vmem>>, vector<8x4xf32>,
    %c0_49 = arith.constant 0 : index
    %c0_50 = arith.constant 0 : index
    %55 = vector.load %arg10[%c0_49, %c0_50] : memref<8x128xf32, #tpu.memory_space<vmem>>, vector<8x128xf32>
    %56 = arith.truncf %55 : vector<8x128xf32> to vector<8x128xbf16>
    %c4 = arith.constant 4 : index
    %c0_51 = arith.constant 0 : index
    %c0_52 = arith.constant 0 : index
    %57 = vector.load %arg7[%c4, %c0_51, %c0_52] : memref<17x128x128xbf16, #tpu.memory_space<vmem>>, vector<1x128x128xbf16>
    %58 = vector.shape_cast %57 : vector<1x128x128xbf16> to vector<128x128xbf16>
    %c5 = arith.constant 5 : index
    %c0_53 = arith.constant 0 : index
    %c0_54 = arith.constant 0 : index
    %59 = vector.load %arg7[%c5, %c0_53, %c0_54] : memref<17x128x128xbf16, #tpu.memory_space<vmem>>, vector<1x128x128xbf16>
    %60 = vector.shape_cast %59 : vector<1x128x128xbf16> to vector<128x128xbf16>
    %c4_55 = arith.constant 4 : index
    %c0_56 = arith.constant 0 : index
    %c0_57 = arith.constant 0 : index
    %61 = vector.load %arg8[%c4_55, %c0_56, %c0_57] : memref<16x1x128xf32, #tpu.memory_space<vmem>>, vector<1x1x128xf32>
    %62 = vector.shape_cast %61 : vector<1x1x128xf32> to vector<1x128xf32>
    %cst_58 = arith.constant dense<0.000000e+00> : vector<8x128xf32>
    %63 = tpu.matmul %50, %58, %cst_58 {dimension_numbers = #tpu.dot_dimension_numbers<[1], [0], [0], [1], [0, 0, 1, 1], [], []>} : vector<8x128xbf16>, vector<128x128xbf16>, vector<8x128xf32> -> vector<8x128xf32>
    %cst_59 = arith.constant dense<0.000000e+00> : vector<8x128xf32>
    %64 = tpu.matmul %56, %60, %cst_59 {dimension_numbers = #tpu.dot_dimension_numbers<[1], [0], [0], [1], [0, 0, 1, 1], [], []>} : vector<8x128xbf16>, vector<128x128xbf16>, vector<8x128xf32> -> vector<8x128xf32>
    %65 = arith.addf %63, %64 : vector<8x128xf32>
    %66 = vector.broadcast %62 : vector<1x128xf32> to vector<8x128xf32>
    %67 = arith.addf %65, %66 : vector<8x128xf32>
    %68 = math.tanh %67 : vector<8x128xf32>
    %69 = arith.truncf %68 : vector<8x128xf32> to vector<8x128xbf16>
    %c6 = arith.constant 6 : index
    %c0_60 = arith.constant 0 : index
    %c0_61 = arith.constant 0 : index
    %70 = vector.load %arg7[%c6, %c0_60, %c0_61] : memref<17x128x128xbf16, #tpu.memory_space<vmem>>, vector<1x128x128xbf16>
    %71 = vector.shape_cast %70 : vector<1x128x128xbf16> to vector<128x128xbf16>
    %c5_62 = arith.constant 5 : index
    %c0_63 = arith.constant 0 : index
    %c0_64 = arith.constant 0 : index
    %72 = vector.load %arg8[%c5_62, %c0_63, %c0_64] : memref<16x1x128xf32, #tpu.memory_space<vmem>>, vector<1x1x128xf32>
    %73 = vector.shape_cast %72 : vector<1x1x128xf32> to vector<1x128xf32>
    %cst_65 = arith.constant dense<0.000000e+00> : vector<8x128xf32>
    %74 = tpu.matmul %69, %71, %cst_65 {dimension_numbers = #tpu.dot_dimension_numbers<[1], [0], [0], [1], [0, 0, 1, 1], [], []>} : vector<8x128xbf16>, vector<128x128xbf16>, vector<8x128xf32> -> vector<8x128xf32>
    %75 = vector.broadcast %73 : vector<1x128xf32> to vector<8x128xf32>
    %76 = arith.addf %74, %75 : vector<8x128xf32>
    %77 = math.tanh %76 : vector<8x128xf32>
    %78 = arith.truncf %77 : vector<8x128xf32> to vector<8x128xbf16>
    %cst_66 = arith.constant 0.000000e+00 : f32
    %79 = vector.broadcast %cst_66 : f32 to vector<8x128xf32>
    %c0_67 = arith.constant 0 : index
    %c0_68 = arith.constant 0 : index
    %80 = vector.load %arg10[%c0_67, %c0_68] : memref<8x128xf32, #tpu.memory_space<vmem>>, vector<8x128xf32>
    tpu.vector_store %arg10[%c0_67, %c0_68], %79 {strides = array<i32>} : memref<8x128xf32, #tpu.memory_space<vmem>>, vector<8x128xf32>,
    %c0_69 = arith.constant 0 : index
    %c0_70 = arith.constant 0 : index
    %81 = vector.load %arg4[%c0_69, %c0_70] : memref<8x8xf32, #tpu.memory_space<vmem>>, vector<8x8xf32>
    %c0_71 = arith.constant 0 : index
    %c0_72 = arith.constant 0 : index
    %82 = vector.load %arg10[%c0_71, %c0_72] : memref<8x128xf32, #tpu.memory_space<vmem>>, vector<8x8xf32>
    tpu.vector_store %arg10[%c0_71, %c0_72], %81 {strides = array<i32>} : memref<8x128xf32, #tpu.memory_space<vmem>>, vector<8x8xf32>,
    %c0_73 = arith.constant 0 : index
    %c0_74 = arith.constant 0 : index
    %83 = vector.load %arg10[%c0_73, %c0_74] : memref<8x128xf32, #tpu.memory_space<vmem>>, vector<8x128xf32>
    %c7 = arith.constant 7 : index
    %c0_75 = arith.constant 0 : index
    %c0_76 = arith.constant 0 : index
    %84 = vector.load %arg7[%c7, %c0_75, %c0_76] : memref<17x128x128xbf16, #tpu.memory_space<vmem>>, vector<1x128x128xbf16>
    %85 = vector.shape_cast %84 : vector<1x128x128xbf16> to vector<128x128xbf16>
    %c6_77 = arith.constant 6 : index
    %c0_78 = arith.constant 0 : index
    %c0_79 = arith.constant 0 : index
    %86 = vector.load %arg8[%c6_77, %c0_78, %c0_79] : memref<16x1x128xf32, #tpu.memory_space<vmem>>, vector<1x1x128xf32>
    %87 = vector.shape_cast %86 : vector<1x1x128xf32> to vector<1x128xf32>
    %c8 = arith.constant 8 : index
    %c0_80 = arith.constant 0 : index
    %c0_81 = arith.constant 0 : index
    %88 = vector.load %arg7[%c8, %c0_80, %c0_81] : memref<17x128x128xbf16, #tpu.memory_space<vmem>>, vector<1x128x128xbf16>
    %89 = vector.shape_cast %88 : vector<1x128x128xbf16> to vector<128x128xbf16>
    %c7_82 = arith.constant 7 : index
    %c0_83 = arith.constant 0 : index
    %c0_84 = arith.constant 0 : index
    %90 = vector.load %arg8[%c7_82, %c0_83, %c0_84] : memref<16x1x128xf32, #tpu.memory_space<vmem>>, vector<1x1x128xf32>
    %91 = vector.shape_cast %90 : vector<1x1x128xf32> to vector<1x128xf32>
    %cst_85 = arith.constant dense<0.000000e+00> : vector<8x128xf32>
    %92 = tpu.matmul %78, %85, %cst_85 {dimension_numbers = #tpu.dot_dimension_numbers<[1], [0], [0], [1], [0, 0, 1, 1], [], []>} : vector<8x128xbf16>, vector<128x128xbf16>, vector<8x128xf32> -> vector<8x128xf32>
    %93 = vector.broadcast %87 : vector<1x128xf32> to vector<8x128xf32>
    %94 = arith.addf %92, %93 : vector<8x128xf32>
    %95 = math.tanh %94 : vector<8x128xf32>
    %cst_86 = arith.constant dense<0.000000e+00> : vector<8x128xf32>
    %96 = tpu.matmul %78, %89, %cst_86 {dimension_numbers = #tpu.dot_dimension_numbers<[1], [0], [0], [1], [0, 0, 1, 1], [], []>} : vector<8x128xbf16>, vector<128x128xbf16>, vector<8x128xf32> -> vector<8x128xf32>
    %97 = vector.broadcast %91 : vector<1x128xf32> to vector<8x128xf32>
    %98 = arith.addf %96, %97 : vector<8x128xf32>
    %99 = math.tanh %98 : vector<8x128xf32>
    %cst_87 = arith.constant 2.500000e-01 : f32
    %100 = vector.broadcast %cst_87 : f32 to vector<8x128xf32>
    %101 = arith.mulf %100, %99 : vector<8x128xf32>
    %102 = math.exp %101 : vector<8x128xf32>
    %103 = arith.mulf %102, %83 : vector<8x128xf32>
    %104 = arith.addf %95, %103 : vector<8x128xf32>
    %105 = arith.truncf %104 : vector<8x128xf32> to vector<8x128xbf16>
    %c9 = arith.constant 9 : index
    %c0_88 = arith.constant 0 : index
    %c0_89 = arith.constant 0 : index
    %106 = vector.load %arg7[%c9, %c0_88, %c0_89] : memref<17x128x128xbf16, #tpu.memory_space<vmem>>, vector<1x128x128xbf16>
    %107 = vector.shape_cast %106 : vector<1x128x128xbf16> to vector<128x128xbf16>
    %c8_90 = arith.constant 8 : index
    %c0_91 = arith.constant 0 : index
    %c0_92 = arith.constant 0 : index
    %108 = vector.load %arg8[%c8_90, %c0_91, %c0_92] : memref<16x1x128xf32, #tpu.memory_space<vmem>>, vector<1x1x128xf32>
    %109 = vector.shape_cast %108 : vector<1x1x128xf32> to vector<1x128xf32>
    %cst_93 = arith.constant dense<0.000000e+00> : vector<8x128xf32>
    %110 = tpu.matmul %105, %107, %cst_93 {dimension_numbers = #tpu.dot_dimension_numbers<[1], [0], [0], [1], [0, 0, 1, 1], [], []>} : vector<8x128xbf16>, vector<128x128xbf16>, vector<8x128xf32> -> vector<8x128xf32>
    %111 = vector.broadcast %109 : vector<1x128xf32> to vector<8x128xf32>
    %112 = arith.addf %110, %111 : vector<8x128xf32>
    %113 = math.tanh %112 : vector<8x128xf32>
    %114 = arith.truncf %113 : vector<8x128xf32> to vector<8x128xbf16>
    %c10 = arith.constant 10 : index
    %c0_94 = arith.constant 0 : index
    %c0_95 = arith.constant 0 : index
    %115 = vector.load %arg7[%c10, %c0_94, %c0_95] : memref<17x128x128xbf16, #tpu.memory_space<vmem>>, vector<1x128x128xbf16>
    %116 = vector.shape_cast %115 : vector<1x128x128xbf16> to vector<128x128xbf16>
    %c9_96 = arith.constant 9 : index
    %c0_97 = arith.constant 0 : index
    %c0_98 = arith.constant 0 : index
    %117 = vector.load %arg8[%c9_96, %c0_97, %c0_98] : memref<16x1x128xf32, #tpu.memory_space<vmem>>, vector<1x1x128xf32>
    %118 = vector.shape_cast %117 : vector<1x1x128xf32> to vector<1x128xf32>
    %cst_99 = arith.constant dense<0.000000e+00> : vector<8x128xf32>
    %119 = tpu.matmul %114, %116, %cst_99 {dimension_numbers = #tpu.dot_dimension_numbers<[1], [0], [0], [1], [0, 0, 1, 1], [], []>} : vector<8x128xbf16>, vector<128x128xbf16>, vector<8x128xf32> -> vector<8x128xf32>
    %120 = vector.broadcast %118 : vector<1x128xf32> to vector<8x128xf32>
    %121 = arith.addf %119, %120 : vector<8x128xf32>
    %122 = math.tanh %121 : vector<8x128xf32>
    %123 = arith.truncf %122 : vector<8x128xf32> to vector<8x128xbf16>
    %cst_100 = arith.constant 0.000000e+00 : f32
    %124 = vector.broadcast %cst_100 : f32 to vector<8x128xf32>
    %c0_101 = arith.constant 0 : index
    %c0_102 = arith.constant 0 : index
    %125 = vector.load %arg10[%c0_101, %c0_102] : memref<8x128xf32, #tpu.memory_space<vmem>>, vector<8x128xf32>
    tpu.vector_store %arg10[%c0_101, %c0_102], %124 {strides = array<i32>} : memref<8x128xf32, #tpu.memory_space<vmem>>, vector<8x128xf32>,
    %c0_103 = arith.constant 0 : index
    %c0_104 = arith.constant 0 : index
    %126 = vector.load %arg5[%c0_103, %c0_104] : memref<8x16xf32, #tpu.memory_space<vmem>>, vector<8x16xf32>
    %c0_105 = arith.constant 0 : index
    %c0_106 = arith.constant 0 : index
    %127 = vector.load %arg10[%c0_105, %c0_106] : memref<8x128xf32, #tpu.memory_space<vmem>>, vector<8x16xf32>
    tpu.vector_store %arg10[%c0_105, %c0_106], %126 {strides = array<i32>} : memref<8x128xf32, #tpu.memory_space<vmem>>, vector<8x16xf32>,
    %c0_107 = arith.constant 0 : index
    %c0_108 = arith.constant 0 : index
    %128 = vector.load %arg10[%c0_107, %c0_108] : memref<8x128xf32, #tpu.memory_space<vmem>>, vector<8x128xf32>
    %c11 = arith.constant 11 : index
    %c0_109 = arith.constant 0 : index
    %c0_110 = arith.constant 0 : index
    %129 = vector.load %arg7[%c11, %c0_109, %c0_110] : memref<17x128x128xbf16, #tpu.memory_space<vmem>>, vector<1x128x128xbf16>
    %130 = vector.shape_cast %129 : vector<1x128x128xbf16> to vector<128x128xbf16>
    %c10_111 = arith.constant 10 : index
    %c0_112 = arith.constant 0 : index
    %c0_113 = arith.constant 0 : index
    %131 = vector.load %arg8[%c10_111, %c0_112, %c0_113] : memref<16x1x128xf32, #tpu.memory_space<vmem>>, vector<1x1x128xf32>
    %132 = vector.shape_cast %131 : vector<1x1x128xf32> to vector<1x128xf32>
    %c12 = arith.constant 12 : index
    %c0_114 = arith.constant 0 : index
    %c0_115 = arith.constant 0 : index
    %133 = vector.load %arg7[%c12, %c0_114, %c0_115] : memref<17x128x128xbf16, #tpu.memory_space<vmem>>, vector<1x128x128xbf16>
    %134 = vector.shape_cast %133 : vector<1x128x128xbf16> to vector<128x128xbf16>
    %c11_116 = arith.constant 11 : index
    %c0_117 = arith.constant 0 : index
    %c0_118 = arith.constant 0 : index
    %135 = vector.load %arg8[%c11_116, %c0_117, %c0_118] : memref<16x1x128xf32, #tpu.memory_space<vmem>>, vector<1x1x128xf32>
    %136 = vector.shape_cast %135 : vector<1x1x128xf32> to vector<1x128xf32>
    %cst_119 = arith.constant dense<0.000000e+00> : vector<8x128xf32>
    %137 = tpu.matmul %123, %130, %cst_119 {dimension_numbers = #tpu.dot_dimension_numbers<[1], [0], [0], [1], [0, 0, 1, 1], [], []>} : vector<8x128xbf16>, vector<128x128xbf16>, vector<8x128xf32> -> vector<8x128xf32>
    %138 = vector.broadcast %132 : vector<1x128xf32> to vector<8x128xf32>
    %139 = arith.addf %137, %138 : vector<8x128xf32>
    %140 = math.tanh %139 : vector<8x128xf32>
    %cst_120 = arith.constant dense<0.000000e+00> : vector<8x128xf32>
    %141 = tpu.matmul %123, %134, %cst_120 {dimension_numbers = #tpu.dot_dimension_numbers<[1], [0], [0], [1], [0, 0, 1, 1], [], []>} : vector<8x128xbf16>, vector<128x128xbf16>, vector<8x128xf32> -> vector<8x128xf32>
    %142 = vector.broadcast %136 : vector<1x128xf32> to vector<8x128xf32>
    %143 = arith.addf %141, %142 : vector<8x128xf32>
    %144 = math.tanh %143 : vector<8x128xf32>
    %cst_121 = arith.constant 2.500000e-01 : f32
    %145 = vector.broadcast %cst_121 : f32 to vector<8x128xf32>
    %146 = arith.mulf %145, %144 : vector<8x128xf32>
    %147 = math.exp %146 : vector<8x128xf32>
    %148 = arith.mulf %147, %128 : vector<8x128xf32>
    %149 = arith.addf %140, %148 : vector<8x128xf32>
    %c13 = arith.constant 13 : index
    %c0_122 = arith.constant 0 : index
    %c0_123 = arith.constant 0 : index
    %150 = vector.load %arg7[%c13, %c0_122, %c0_123] : memref<17x128x128xbf16, #tpu.memory_space<vmem>>, vector<1x128x128xbf16>
    %151 = vector.shape_cast %150 : vector<1x128x128xbf16> to vector<128x128xbf16>
    %c12_124 = arith.constant 12 : index
    %c0_125 = arith.constant 0 : index
    %c0_126 = arith.constant 0 : index
    %152 = vector.load %arg8[%c12_124, %c0_125, %c0_126] : memref<16x1x128xf32, #tpu.memory_space<vmem>>, vector<1x1x128xf32>
    %153 = vector.shape_cast %152 : vector<1x1x128xf32> to vector<1x128xf32>
    %cst_127 = arith.constant dense<0.000000e+00> : vector<8x128xf32>
    %154 = tpu.matmul %105, %151, %cst_127 {dimension_numbers = #tpu.dot_dimension_numbers<[1], [0], [0], [1], [0, 0, 1, 1], [], []>} : vector<8x128xbf16>, vector<128x128xbf16>, vector<8x128xf32> -> vector<8x128xf32>
    %155 = vector.broadcast %153 : vector<1x128xf32> to vector<8x128xf32>
    %156 = arith.addf %154, %155 : vector<8x128xf32>
    %157 = math.tanh %156 : vector<8x128xf32>
    %158 = arith.truncf %157 : vector<8x128xf32> to vector<8x128xbf16>
    %c14 = arith.constant 14 : index
    %c0_128 = arith.constant 0 : index
    %c0_129 = arith.constant 0 : index
    %159 = vector.load %arg7[%c14, %c0_128, %c0_129] : memref<17x128x128xbf16, #tpu.memory_space<vmem>>, vector<1x128x128xbf16>
    %160 = vector.shape_cast %159 : vector<1x128x128xbf16> to vector<128x128xbf16>
    %c13_130 = arith.constant 13 : index
    %c0_131 = arith.constant 0 : index
    %c0_132 = arith.constant 0 : index
    %161 = vector.load %arg8[%c13_130, %c0_131, %c0_132] : memref<16x1x128xf32, #tpu.memory_space<vmem>>, vector<1x1x128xf32>
    %162 = vector.shape_cast %161 : vector<1x1x128xf32> to vector<1x128xf32>
    %cst_133 = arith.constant dense<0.000000e+00> : vector<8x128xf32>
    %163 = tpu.matmul %158, %160, %cst_133 {dimension_numbers = #tpu.dot_dimension_numbers<[1], [0], [0], [1], [0, 0, 1, 1], [], []>} : vector<8x128xbf16>, vector<128x128xbf16>, vector<8x128xf32> -> vector<8x128xf32>
    %164 = vector.broadcast %162 : vector<1x128xf32> to vector<8x128xf32>
    %165 = arith.addf %163, %164 : vector<8x128xf32>
    %166 = math.tanh %165 : vector<8x128xf32>
    %167 = arith.truncf %166 : vector<8x128xf32> to vector<8x128xbf16>
    %cst_134 = arith.constant 0.000000e+00 : f32
    %168 = vector.broadcast %cst_134 : f32 to vector<8x128xf32>
    %c0_135 = arith.constant 0 : index
    %c0_136 = arith.constant 0 : index
    %169 = vector.load %arg10[%c0_135, %c0_136] : memref<8x128xf32, #tpu.memory_space<vmem>>, vector<8x128xf32>
    tpu.vector_store %arg10[%c0_135, %c0_136], %168 {strides = array<i32>} : memref<8x128xf32, #tpu.memory_space<vmem>>, vector<8x128xf32>,
    %c0_137 = arith.constant 0 : index
    %c0_138 = arith.constant 0 : index
    %170 = vector.load %arg6[%c0_137, %c0_138] : memref<8x1xf32, #tpu.memory_space<vmem>>, vector<8x1xf32>
    %c0_139 = arith.constant 0 : index
    %c0_140 = arith.constant 0 : index
    %171 = vector.load %arg10[%c0_139, %c0_140] : memref<8x128xf32, #tpu.memory_space<vmem>>, vector<8x1xf32>
    tpu.vector_store %arg10[%c0_139, %c0_140], %170 {strides = array<i32>} : memref<8x128xf32, #tpu.memory_space<vmem>>, vector<8x1xf32>,
    %c0_141 = arith.constant 0 : index
    %c0_142 = arith.constant 0 : index
    %172 = vector.load %arg10[%c0_141, %c0_142] : memref<8x128xf32, #tpu.memory_space<vmem>>, vector<8x128xf32>
    %c15 = arith.constant 15 : index
    %c0_143 = arith.constant 0 : index
    %c0_144 = arith.constant 0 : index
    %173 = vector.load %arg7[%c15, %c0_143, %c0_144] : memref<17x128x128xbf16, #tpu.memory_space<vmem>>, vector<1x128x128xbf16>
    %174 = vector.shape_cast %173 : vector<1x128x128xbf16> to vector<128x128xbf16>
    %c14_145 = arith.constant 14 : index
    %c0_146 = arith.constant 0 : index
    %c0_147 = arith.constant 0 : index
    %175 = vector.load %arg8[%c14_145, %c0_146, %c0_147] : memref<16x1x128xf32, #tpu.memory_space<vmem>>, vector<1x1x128xf32>
    %176 = vector.shape_cast %175 : vector<1x1x128xf32> to vector<1x128xf32>
    %c16 = arith.constant 16 : index
    %c0_148 = arith.constant 0 : index
    %c0_149 = arith.constant 0 : index
    %177 = vector.load %arg7[%c16, %c0_148, %c0_149] : memref<17x128x128xbf16, #tpu.memory_space<vmem>>, vector<1x128x128xbf16>
    %178 = vector.shape_cast %177 : vector<1x128x128xbf16> to vector<128x128xbf16>
    %c15_150 = arith.constant 15 : index
    %c0_151 = arith.constant 0 : index
    %c0_152 = arith.constant 0 : index
    %179 = vector.load %arg8[%c15_150, %c0_151, %c0_152] : memref<16x1x128xf32, #tpu.memory_space<vmem>>, vector<1x1x128xf32>
    %180 = vector.shape_cast %179 : vector<1x1x128xf32> to vector<1x128xf32>
    %cst_153 = arith.constant dense<0.000000e+00> : vector<8x128xf32>
    %181 = tpu.matmul %167, %174, %cst_153 {dimension_numbers = #tpu.dot_dimension_numbers<[1], [0], [0], [1], [0, 0, 1, 1], [], []>} : vector<8x128xbf16>, vector<128x128xbf16>, vector<8x128xf32> -> vector<8x128xf32>
    %182 = vector.broadcast %176 : vector<1x128xf32> to vector<8x128xf32>
    %183 = arith.addf %181, %182 : vector<8x128xf32>
    %184 = math.tanh %183 : vector<8x128xf32>
    %cst_154 = arith.constant dense<0.000000e+00> : vector<8x128xf32>
    %185 = tpu.matmul %167, %178, %cst_154 {dimension_numbers = #tpu.dot_dimension_numbers<[1], [0], [0], [1], [0, 0, 1, 1], [], []>} : vector<8x128xbf16>, vector<128x128xbf16>, vector<8x128xf32> -> vector<8x128xf32>
    %186 = vector.broadcast %180 : vector<1x128xf32> to vector<8x128xf32>
    %187 = arith.addf %185, %186 : vector<8x128xf32>
    %188 = math.tanh %187 : vector<8x128xf32>
    %cst_155 = arith.constant 2.500000e-01 : f32
    %189 = vector.broadcast %cst_155 : f32 to vector<8x128xf32>
    %190 = arith.mulf %189, %188 : vector<8x128xf32>
    %191 = math.exp %190 : vector<8x128xf32>
    %192 = arith.mulf %191, %172 : vector<8x128xf32>
    %193 = arith.addf %184, %192 : vector<8x128xf32>
    %c0_156 = arith.constant 0 : index
    %c0_157 = arith.constant 0 : index
    %194 = vector.load %arg9[%c0_156, %c0_157] : memref<8x256xf32, #tpu.memory_space<vmem>>, vector<8x128xf32>
    tpu.vector_store %arg9[%c0_156, %c0_157], %149 {strides = array<i32>} : memref<8x256xf32, #tpu.memory_space<vmem>>, vector<8x128xf32>,
    %c0_158 = arith.constant 0 : index
    %c128 = arith.constant 128 : index
    %195 = vector.load %arg9[%c0_158, %c128] : memref<8x256xf32, #tpu.memory_space<vmem>>, vector<8x128xf32>
    tpu.vector_store %arg9[%c0_158, %c128], %193 {strides = array<i32>} : memref<8x256xf32, #tpu.memory_space<vmem>>, vector<8x128xf32>,
    return
  }
  func.func @transform_0(%arg0: i32) -> (i32, i32) {
    %c0_i32 = arith.constant 0 : i32
    %c0_i32_0 = arith.constant 0 : i32
    return %arg0, %c0_i32 : i32, i32
  }
  func.func @transform_1(%arg0: i32) -> (i32, i32) {
    %c0_i32 = arith.constant 0 : i32
    %c0_i32_0 = arith.constant 0 : i32
    return %arg0, %c0_i32 : i32, i32
  }
  func.func @transform_2(%arg0: i32) -> (i32, i32) {
    %c0_i32 = arith.constant 0 : i32
    %c0_i32_0 = arith.constant 0 : i32
    return %arg0, %c0_i32 : i32, i32
  }
  func.func @transform_3(%arg0: i32) -> (i32, i32) {
    %c0_i32 = arith.constant 0 : i32
    %c0_i32_0 = arith.constant 0 : i32
    return %arg0, %c0_i32 : i32, i32
  }
  func.func @transform_4(%arg0: i32) -> (i32, i32) {
    %c0_i32 = arith.constant 0 : i32
    %c0_i32_0 = arith.constant 0 : i32
    return %arg0, %c0_i32 : i32, i32
  }
  func.func @transform_5(%arg0: i32) -> (i32, i32) {
    %c0_i32 = arith.constant 0 : i32
    %c0_i32_0 = arith.constant 0 : i32
    return %arg0, %c0_i32 : i32, i32
  }
  func.func @transform_6(%arg0: i32) -> (i32, i32, i32) {
    %c0_i32 = arith.constant 0 : i32
    %c0_i32_0 = arith.constant 0 : i32
    %c0_i32_1 = arith.constant 0 : i32
    %c0_i32_2 = arith.constant 0 : i32
    return %c0_i32, %c0_i32_0, %c0_i32_1 : i32, i32, i32
  }
  func.func @transform_7(%arg0: i32) -> (i32, i32, i32) {
    %c0_i32 = arith.constant 0 : i32
    %c0_i32_0 = arith.constant 0 : i32
    %c0_i32_1 = arith.constant 0 : i32
    %c0_i32_2 = arith.constant 0 : i32
    return %c0_i32, %c0_i32_0, %c0_i32_1 : i32, i32, i32
  }
  func.func @transform_8(%arg0: i32) -> (i32, i32) {
    %c0_i32 = arith.constant 0 : i32
    %c0_i32_0 = arith.constant 0 : i32
    return %arg0, %c0_i32 : i32, i32
  }
}

</mosaic_0001>

<llo_original>
// kernel: dynamics_forward.1
$region0: #{dynamics_forward.1}
  #allocation0 [shape = 'u32[]', space=smem, size = 0x4, offset = 0x4, fixed_abs, tag = 'smem constant byte address 0x4 - core index']
  #allocation1 [shape = 'u32[144,128]{1,0:T(1,128)}', space=vmem, size = 0x12000, scoped, tag = 'internal scratch']
  #allocation2 [shape = 'f32[8,128]{1,0:T(8,128)}', space=vmem, size = 0x1000, scoped, tag = 'scratch operand']
  %s0 = inlined_call_operand.vmem [shape: f32[8,16], index: 0, kind: input, shape index: {}]
  %s1 = inlined_call_operand.vmem [shape: f32[8,4], index: 1, kind: input, shape index: {}]
  %s2 = inlined_call_operand.vmem [shape: f32[8,8], index: 2, kind: input, shape index: {}]
  %s3 = inlined_call_operand.hbm [shape: f32[8,8], index: 3, kind: input, shape index: {}]
  %s4 = inlined_call_operand.vmem [shape: f32[8,16], index: 4, kind: input, shape index: {}]
  %s5 = inlined_call_operand.vmem [shape: f32[8,1], index: 5, kind: input, shape index: {}]
  %s6 = inlined_call_operand.hbm [shape: bf16[17,128,128], index: 6, kind: input, shape index: {}]
  %s7 = inlined_call_operand.vmem [shape: f32[16,1,128], index: 7, kind: input, shape index: {}]
  %s8 = inlined_call_operand.vmem [shape: f32[8,256], index: 8, kind: output, shape index: {}]
  %s9 = sld [smem:[#allocation0]]
  $region50: #{dynamics_forward.1} parent=0
    _
  %s11 = ssub.s32 1, %s9
  %s12 = scalar_select 0, %s11, %s9
  $region1: #{dynamics_forward.1} parent=0
    #allocation3 [shape = 'u8[4096]{0}', space=vmem, size = 0x1000, scoped, tag = 'input window, operand 3, single buffered']
    #allocation4 [shape = 's32[1]{0}', space=sflag, size = 0x4, scoped, tag = 'scoped memory for dynamics_forward.1']
    #allocation5 [shape = 'u8[557056]{0}', space=vmem, size = 0x88000, scoped, tag = 'input window, operand 6, single buffered']
    #allocation6 [shape = 's32[1]{0}', space=sflag, size = 0x4, scoped, tag = 'scoped memory for dynamics_forward.1']
    %13 = vsyncpa [#allocation4], 0
    %14 = vsyncpa [#allocation6], 0
    // Predicated region
    $region2: #{dynamics_forward.1} parent=1 // pred_check
      _
    $region3: #{dynamics_forward.1} parent=1 // pred_check_branch
      %16 = sbr.rel (0) target = $region5
    $region4: #{dynamics_forward.1} parent=1 // pred_region
      _
    $region5: #{dynamics_forward.1} parent=1 // pred_fallthru
      _
    // Predicated region
    $region6: #{dynamics_forward.1} parent=1 // pred_check
      _
    $region7: #{dynamics_forward.1} parent=1 // pred_check_branch
      %18 = sbr.rel (0) target = $region9
    $region8: #{dynamics_forward.1} parent=1 // pred_region
      _
    $region9: #{dynamics_forward.1} parent=1 // pred_fallthru
      _
    // Predicated region
    $region10: #{dynamics_forward.1} parent=1 // pred_check
      _
    $region11: #{dynamics_forward.1} parent=1 // pred_check_branch
      %20 = sbr.rel (0) target = $region13
    $region12: #{dynamics_forward.1} parent=1 // pred_region
      _
    $region13: #{dynamics_forward.1} parent=1 // pred_fallthru
      _
    // Predicated region
    $region14: #{dynamics_forward.1} parent=1 // pred_check
      _
    $region15: #{dynamics_forward.1} parent=1 // pred_check_branch
      %22 = sbr.rel (0) target = $region17
    $region16: #{dynamics_forward.1} parent=1 // pred_region
      %s24 = ssub.s32 128, 128
      %25 = vsyncadd [#allocation4], %s24
      %s27 = sshll.u32 [#allocation3], 4
      %s28 = int_to_ptr.vmem [resolvable:$true] %s27
      %30 = dma.hbm_to_vmem [thread:$0]  %s3, 128, %s28, [#allocation4]
    $region17: #{dynamics_forward.1} parent=1 // pred_fallthru
      _
    // Predicated region
    $region18: #{dynamics_forward.1} parent=1 // pred_check
      _
    $region19: #{dynamics_forward.1} parent=1 // pred_check_branch
      %32 = sbr.rel (0) target = $region21
    $region20: #{dynamics_forward.1} parent=1 // pred_region
      _
    $region21: #{dynamics_forward.1} parent=1 // pred_fallthru
      _
    // Predicated region
    $region22: #{dynamics_forward.1} parent=1 // pred_check
      _
    $region23: #{dynamics_forward.1} parent=1 // pred_check_branch
      %34 = sbr.rel (0) target = $region25
    $region24: #{dynamics_forward.1} parent=1 // pred_region
      _
    $region25: #{dynamics_forward.1} parent=1 // pred_fallthru
      _
    // Predicated region
    $region26: #{dynamics_forward.1} parent=1 // pred_check
      _
    $region27: #{dynamics_forward.1} parent=1 // pred_check_branch
      %36 = sbr.rel (0) target = $region29
    $region28: #{dynamics_forward.1} parent=1 // pred_region
      %s38 = ssub.s32 17408, 17408
      %39 = vsyncadd [#allocation6], %s38
      %s40 = sshll.u32 [#allocation5], 4
      %s41 = int_to_ptr.vmem [resolvable:$true] %s40
      %46 = dma.hbm_to_vmem [thread:$0]  %s6, 17408, %s41, [#allocation6], 64, 64, 4
    $region29: #{dynamics_forward.1} parent=1 // pred_fallthru
      _
    // Predicated region
    $region30: #{dynamics_forward.1} parent=1 // pred_check
      _
    $region31: #{dynamics_forward.1} parent=1 // pred_check_branch
      %48 = sbr.rel (0) target = $region33
    $region32: #{dynamics_forward.1} parent=1 // pred_region
      _
    $region33: #{dynamics_forward.1} parent=1 // pred_fallthru
      _
    // Predicated region
    $region34: #{dynamics_forward.1} parent=1 // pred_check
      _
    $region35: #{dynamics_forward.1} parent=1 // pred_check_branch
      %50 = sbr.rel (0) target = $region37
    $region36: #{dynamics_forward.1} parent=1 // pred_region
      %51 = dma.done [#allocation4], 128
    $region37: #{dynamics_forward.1} parent=1 // pred_fallthru
      _
    // Predicated region
    $region38: #{dynamics_forward.1} parent=1 // pred_check
      _
    $region39: #{dynamics_forward.1} parent=1 // pred_check_branch
      %53 = sbr.rel (0) target = $region41
    $region40: #{dynamics_forward.1} parent=1 // pred_region
      %54 = dma.done [#allocation6], 17408
    $region41: #{dynamics_forward.1} parent=1 // pred_fallthru
      _
    %56 = vst [vmem:[#allocation2] sm:$0xff] 0.0
    %v57 = vld [vmem:[%s0] sm:$0xff]
    %vm58 = vcmask 130048
    %59 = vst.msk [vmem:[#allocation2] sm:$0xff] %vm58, %v57
    %v60 = vld [vmem:[#allocation2] sm:$0xff]
    %v61 = vpack.c.bf16 %v60, %v60
    %v62 = vld [vmem:[#allocation5] sm:$0xf]
    %v63 = vld [vmem:[#allocation5 + $0x4] sm:$0xf]
    %v64 = vld [vmem:[#allocation5 + $0x8] sm:$0xf]
    %v65 = vld [vmem:[#allocation5 + $0xc] sm:$0xf]
    %v66 = vld [vmem:[#allocation5 + $0x10] sm:$0xf]
    %v67 = vld [vmem:[#allocation5 + $0x14] sm:$0xf]
    %v68 = vld [vmem:[#allocation5 + $0x18] sm:$0xf]
    %v69 = vld [vmem:[#allocation5 + $0x1c] sm:$0xf]
    %v70 = vld [vmem:[#allocation5 + $0x20] sm:$0xf]
    %v71 = vld [vmem:[#allocation5 + $0x24] sm:$0xf]
    %v72 = vld [vmem:[#allocation5 + $0x28] sm:$0xf]
    %v73 = vld [vmem:[#allocation5 + $0x2c] sm:$0xf]
    %v74 = vld [vmem:[#allocation5 + $0x30] sm:$0xf]
    %v75 = vld [vmem:[#allocation5 + $0x34] sm:$0xf]
    %v76 = vld [vmem:[#allocation5 + $0x38] sm:$0xf]
    %v77 = vld [vmem:[#allocation5 + $0x3c] sm:$0xf]
    %v78 = vld [vmem:[%s7] sm:$0x1]
    %v80 = vlaneseq
    %v81 = vshrl.u32 %v80, 7
    %v82 = vsub.s32 0, %v81
    %v83 = vrot.slane %v78, %v82
    %v101 = vunpack.c.l.b16 %v62
    %v102 = vunpack.c.l.b16 %v63
    %v103 = vunpack.c.l.b16 %v64
    %v104 = vunpack.c.l.b16 %v65
    %v105 = vunpack.c.l.b16 %v66
    %v106 = vunpack.c.l.b16 %v67
    %v107 = vunpack.c.l.b16 %v68
    %v108 = vunpack.c.l.b16 %v69
    %v109 = vunpack.c.l.b16 %v70
    %v110 = vunpack.c.l.b16 %v71
    %v111 = vunpack.c.l.b16 %v72
    %v112 = vunpack.c.l.b16 %v73
    %v113 = vunpack.c.l.b16 %v74
    %v114 = vunpack.c.l.b16 %v75
    %v115 = vunpack.c.l.b16 %v76
    %v116 = vunpack.c.l.b16 %v77
    %v117 = vpack.c.b16 %v102, %v101
    %v118 = vpack.c.b16 %v104, %v103
    %v119 = vpack.c.b16 %v106, %v105
    %v120 = vpack.c.b16 %v108, %v107
    %v121 = vpack.c.b16 %v110, %v109
    %v122 = vpack.c.b16 %v112, %v111
    %v123 = vpack.c.b16 %v114, %v113
    %v124 = vpack.c.b16 %v116, %v115
    %133 = vmatprep.subr.bf16.mxu0 0
    %134 = vmatpush1.bf16.msra.mxu0 %v117
    %135 = vmatprep.subr.bf16.mxu0 0
    %136 = vmatpush1.bf16.msra.mxu0 %v118
    %137 = vmatprep.subr.bf16.mxu0 0
    %138 = vmatpush1.bf16.msra.mxu0 %v119
    %139 = vmatprep.subr.bf16.mxu0 0
    %140 = vmatpush1.bf16.msra.mxu0 %v120
    %141 = vmatprep.subr.bf16.mxu0 0
    %142 = vmatpush1.bf16.msra.mxu0 %v121
    %143 = vmatprep.subr.bf16.mxu0 0
    %144 = vmatpush1.bf16.msra.mxu0 %v122
    %145 = vmatprep.subr.bf16.mxu0 0
    %146 = vmatpush1.bf16.msra.mxu0 %v123
    %147 = vmatprep.subr.bf16.mxu0 0
    %148 = vmatpush1.bf16.msra.mxu0 %v124
    %149 = vmatprep.subr.bf16.mxu0 0
    %150 = vmatpush1.bf16.msra.mxu0 0
    %151 = vmatprep.subr.bf16.mxu0 0
    %152 = vmatpush1.bf16.msra.mxu0 0
    %153 = vmatprep.subr.bf16.mxu0 0
    %154 = vmatpush1.bf16.msra.mxu0 0
    %155 = vmatprep.subr.bf16.mxu0 0
    %156 = vmatpush1.bf16.msra.mxu0 0
    %157 = vmatprep.subr.bf16.mxu0 0
    %158 = vmatpush1.bf16.msra.mxu0 0
    %159 = vmatprep.subr.bf16.mxu0 0
    %160 = vmatpush1.bf16.msra.mxu0 0
    %161 = vmatprep.subr.bf16.mxu0 0
    %162 = vmatpush1.bf16.msra.mxu0 0
    %163 = vmatprep.subr.bf16.mxu0 0
    %164 = vmatpush1.bf16.msra.mxu0 0
    %165 = vmatprep.mubr.bf16.mxu0 0
    %166 = vmatmul.mubr.bf16.gmra.mrb[0].mxu0 %v61
    %v167 = vpop.f32.mrb[0].mxu0
    %v168 = vadd.f32 %v83, %v167
    %v169 = vpop.f32.mrb[0].mxu0
    %v170 = vpop.f32.mrb[0].mxu0
    %v171 = vpop.f32.mrb[0].mxu0
    %172 = vdwg.mxu0
    %v173 = vtanh.pop %v168
    %v174 = vpack.c.bf16 %v173, %v173
    %s175 = scalar_lea.vmem [#allocation5], 64
    %v176 = vld [vmem:[%s175] sm:$0xf]
    %v177 = vld [vmem:[%s175 + $0x4] sm:$0xf]
    %v178 = vld [vmem:[%s175 + $0x8] sm:$0xf]
    %v179 = vld [vmem:[%s175 + $0xc] sm:$0xf]
    %v180 = vld [vmem:[%s175 + $0x10] sm:$0xf]
    %v181 = vld [vmem:[%s175 + $0x14] sm:$0xf]
    %v182 = vld [vmem:[%s175 + $0x18] sm:$0xf]
    %v183 = vld [vmem:[%s175 + $0x1c] sm:$0xf]
    %v184 = vld [vmem:[%s175 + $0x20] sm:$0xf]
    %v185 = vld [vmem:[%s175 + $0x24] sm:$0xf]
    %v186 = vld [vmem:[%s175 + $0x28] sm:$0xf]
    %v187 = vld [vmem:[%s175 + $0x2c] sm:$0xf]
    %v188 = vld [vmem:[%s175 + $0x30] sm:$0xf]
    %v189 = vld [vmem:[%s175 + $0x34] sm:$0xf]
    %v190 = vld [vmem:[%s175 + $0x38] sm:$0xf]
    %v191 = vld [vmem:[%s175 + $0x3c] sm:$0xf]
    %s192 = scalar_lea.vmem %s7, 1
    %v193 = vld [vmem:[%s192] sm:$0x1]
    %v195 = vlaneseq
    %v196 = vshrl.u32 %v195, 7
    %v197 = vsub.s32 0, %v196
    %v198 = vrot.slane %v193, %v197
    %v216 = vunpack.c.l.b16 %v176
    %v217 = vunpack.c.l.b16 %v177
    %v218 = vunpack.c.l.b16 %v178
    %v219 = vunpack.c.l.b16 %v179
    %v220 = vunpack.c.l.b16 %v180
    %v221 = vunpack.c.l.b16 %v181
    %v222 = vunpack.c.l.b16 %v182
    %v223 = vunpack.c.l.b16 %v183
    %v224 = vunpack.c.l.b16 %v184
    %v225 = vunpack.c.l.b16 %v185
    %v226 = vunpack.c.l.b16 %v186
    %v227 = vunpack.c.l.b16 %v187
    %v228 = vunpack.c.l.b16 %v188
    %v229 = vunpack.c.l.b16 %v189
    %v230 = vunpack.c.l.b16 %v190
    %v231 = vunpack.c.l.b16 %v191
    %v232 = vpack.c.b16 %v217, %v216
    %v233 = vpack.c.b16 %v219, %v218
    %v234 = vpack.c.b16 %v221, %v220
    %v235 = vpack.c.b16 %v223, %v222
    %v236 = vpack.c.b16 %v225, %v224
    %v237 = vpack.c.b16 %v227, %v226
    %v238 = vpack.c.b16 %v229, %v228
    %v239 = vpack.c.b16 %v231, %v230
    %248 = vmatprep.subr.bf16.mxu0 0
    %249 = vmatpush1.bf16.msra.mxu0 %v232
    %250 = vmatprep.subr.bf16.mxu0 0
    %251 = vmatpush1.bf16.msra.mxu0 %v233
    %252 = vmatprep.subr.bf16.mxu0 0
    %253 = vmatpush1.bf16.msra.mxu0 %v234
    %254 = vmatprep.subr.bf16.mxu0 0
    %255 = vmatpush1.bf16.msra.mxu0 %v235
    %256 = vmatprep.subr.bf16.mxu0 0
    %257 = vmatpush1.bf16.msra.mxu0 %v236
    %258 = vmatprep.subr.bf16.mxu0 0
    %259 = vmatpush1.bf16.msra.mxu0 %v237
    %260 = vmatprep.subr.bf16.mxu0 0
    %261 = vmatpush1.bf16.msra.mxu0 %v238
    %262 = vmatprep.subr.bf16.mxu0 0
    %263 = vmatpush1.bf16.msra.mxu0 %v239
    %264 = vmatprep.subr.bf16.mxu0 0
    %265 = vmatpush1.bf16.msra.mxu0 0
    %266 = vmatprep.subr.bf16.mxu0 0
    %267 = vmatpush1.bf16.msra.mxu0 0
    %268 = vmatprep.subr.bf16.mxu0 0
    %269 = vmatpush1.bf16.msra.mxu0 0
    %270 = vmatprep.subr.bf16.mxu0 0
    %271 = vmatpush1.bf16.msra.mxu0 0
    %272 = vmatprep.subr.bf16.mxu0 0
    %273 = vmatpush1.bf16.msra.mxu0 0
    %274 = vmatprep.subr.bf16.mxu0 0
    %275 = vmatpush1.bf16.msra.mxu0 0
    %276 = vmatprep.subr.bf16.mxu0 0
    %277 = vmatpush1.bf16.msra.mxu0 0
    %278 = vmatprep.subr.bf16.mxu0 0
    %279 = vmatpush1.bf16.msra.mxu0 0
    %280 = vmatprep.mubr.bf16.mxu0 0
    %281 = vmatmul.mubr.bf16.gmra.mrb[0].mxu0 %v174
    %v282 = vpop.f32.mrb[0].mxu0
    %v283 = vadd.f32 %v198, %v282
    %v284 = vpop.f32.mrb[0].mxu0
    %v285 = vpop.f32.mrb[0].mxu0
    %v286 = vpop.f32.mrb[0].mxu0
    %287 = vdwg.mxu0
    %v288 = vtanh.pop %v283
    %v289 = vpack.c.bf16 %v288, %v288
    %290 = vst [vmem:[#allocation2] sm:$0xff] 0.0
    %v291 = vld [vmem:[%s2] sm:$0xff]
    %vm292 = vcmask 64512
    %293 = vst.msk [vmem:[#allocation2] sm:$0xff] %vm292, %v291
    %v294 = vld [vmem:[#allocation2] sm:$0xff]
    %s295 = scalar_lea.vmem [#allocation5], 128
    %v296 = vld [vmem:[%s295] sm:$0xf]
    %v297 = vld [vmem:[%s295 + $0x4] sm:$0xf]
    %v298 = vld [vmem:[%s295 + $0x8] sm:$0xf]
    %v299 = vld [vmem:[%s295 + $0xc] sm:$0xf]
    %v300 = vld [vmem:[%s295 + $0x10] sm:$0xf]
    %v301 = vld [vmem:[%s295 + $0x14] sm:$0xf]
    %v302 = vld [vmem:[%s295 + $0x18] sm:$0xf]
    %v303 = vld [vmem:[%s295 + $0x1c] sm:$0xf]
    %v304 = vld [vmem:[%s295 + $0x20] sm:$0xf]
    %v305 = vld [vmem:[%s295 + $0x24] sm:$0xf]
    %v306 = vld [vmem:[%s295 + $0x28] sm:$0xf]
    %v307 = vld [vmem:[%s295 + $0x2c] sm:$0xf]
    %v308 = vld [vmem:[%s295 + $0x30] sm:$0xf]
    %v309 = vld [vmem:[%s295 + $0x34] sm:$0xf]
    %v310 = vld [vmem:[%s295 + $0x38] sm:$0xf]
    %v311 = vld [vmem:[%s295 + $0x3c] sm:$0xf]
    %s312 = scalar_lea.vmem %s7, 2
    %v313 = vld [vmem:[%s312] sm:$0x1]
    %s314 = scalar_lea.vmem [#allocation5], 192
    %v315 = vld [vmem:[%s314] sm:$0xf]
    %v316 = vld [vmem:[%s314 + $0x4] sm:$0xf]
    %v317 = vld [vmem:[%s314 + $0x8] sm:$0xf]
    %v318 = vld [vmem:[%s314 + $0xc] sm:$0xf]
    %v319 = vld [vmem:[%s314 + $0x10] sm:$0xf]
    %v320 = vld [vmem:[%s314 + $0x14] sm:$0xf]
    %v321 = vld [vmem:[%s314 + $0x18] sm:$0xf]
    %v322 = vld [vmem:[%s314 + $0x1c] sm:$0xf]
    %v323 = vld [vmem:[%s314 + $0x20] sm:$0xf]
    %v324 = vld [vmem:[%s314 + $0x24] sm:$0xf]
    %v325 = vld [vmem:[%s314 + $0x28] sm:$0xf]
    %v326 = vld [vmem:[%s314 + $0x2c] sm:$0xf]
    %v327 = vld [vmem:[%s314 + $0x30] sm:$0xf]
    %v328 = vld [vmem:[%s314 + $0x34] sm:$0xf]
    %v329 = vld [vmem:[%s314 + $0x38] sm:$0xf]
    %v330 = vld [vmem:[%s314 + $0x3c] sm:$0xf]
    %s331 = scalar_lea.vmem %s7, 3
    %v332 = vld [vmem:[%s331] sm:$0x1]
    %v334 = vlaneseq
    %v335 = vshrl.u32 %v334, 7
    %v336 = vsub.s32 0, %v335
    %v337 = vrot.slane %v313, %v336
    %v355 = vunpack.c.l.b16 %v296
    %v356 = vunpack.c.l.b16 %v297
    %v357 = vunpack.c.l.b16 %v298
    %v358 = vunpack.c.l.b16 %v299
    %v359 = vunpack.c.l.b16 %v300
    %v360 = vunpack.c.l.b16 %v301
    %v361 = vunpack.c.l.b16 %v302
    %v362 = vunpack.c.l.b16 %v303
    %v363 = vunpack.c.l.b16 %v304
    %v364 = vunpack.c.l.b16 %v305
    %v365 = vunpack.c.l.b16 %v306
    %v366 = vunpack.c.l.b16 %v307
    %v367 = vunpack.c.l.b16 %v308
    %v368 = vunpack.c.l.b16 %v309
    %v369 = vunpack.c.l.b16 %v310
    %v370 = vunpack.c.l.b16 %v311
    %v371 = vpack.c.b16 %v356, %v355
    %v372 = vpack.c.b16 %v358, %v357
    %v373 = vpack.c.b16 %v360, %v359
    %v374 = vpack.c.b16 %v362, %v361
    %v375 = vpack.c.b16 %v364, %v363
    %v376 = vpack.c.b16 %v366, %v365
    %v377 = vpack.c.b16 %v368, %v367
    %v378 = vpack.c.b16 %v370, %v369
    %387 = vmatprep.subr.bf16.mxu0 0
    %388 = vmatpush1.bf16.msra.mxu0 %v371
    %389 = vmatprep.subr.bf16.mxu0 0
    %390 = vmatpush1.bf16.msra.mxu0 %v372
    %391 = vmatprep.subr.bf16.mxu0 0
    %392 = vmatpush1.bf16.msra.mxu0 %v373
    %393 = vmatprep.subr.bf16.mxu0 0
    %394 = vmatpush1.bf16.msra.mxu0 %v374
    %395 = vmatprep.subr.bf16.mxu0 0
    %396 = vmatpush1.bf16.msra.mxu0 %v375
    %397 = vmatprep.subr.bf16.mxu0 0
    %398 = vmatpush1.bf16.msra.mxu0 %v376
    %399 = vmatprep.subr.bf16.mxu0 0
    %400 = vmatpush1.bf16.msra.mxu0 %v377
    %401 = vmatprep.subr.bf16.mxu0 0
    %402 = vmatpush1.bf16.msra.mxu0 %v378
    %403 = vmatprep.subr.bf16.mxu0 0
    %404 = vmatpush1.bf16.msra.mxu0 0
    %405 = vmatprep.subr.bf16.mxu0 0
    %406 = vmatpush1.bf16.msra.mxu0 0
    %407 = vmatprep.subr.bf16.mxu0 0
    %408 = vmatpush1.bf16.msra.mxu0 0
    %409 = vmatprep.subr.bf16.mxu0 0
    %410 = vmatpush1.bf16.msra.mxu0 0
    %411 = vmatprep.subr.bf16.mxu0 0
    %412 = vmatpush1.bf16.msra.mxu0 0
    %413 = vmatprep.subr.bf16.mxu0 0
    %414 = vmatpush1.bf16.msra.mxu0 0
    %415 = vmatprep.subr.bf16.mxu0 0
    %416 = vmatpush1.bf16.msra.mxu0 0
    %417 = vmatprep.subr.bf16.mxu0 0
    %418 = vmatpush1.bf16.msra.mxu0 0
    %419 = vmatprep.mubr.bf16.mxu0 0
    %420 = vmatmul.mubr.bf16.gmra.mrb[0].mxu0 %v289
    %v421 = vpop.f32.mrb[0].mxu0
    %v422 = vadd.f32 %v337, %v421
    %v423 = vpop.f32.mrb[0].mxu0
    %v424 = vpop.f32.mrb[0].mxu0
    %v425 = vpop.f32.mrb[0].mxu0
    %426 = vdwg.mxu0
    %v427 = vtanh.pop %v422
    %v429 = vlaneseq
    %v430 = vshrl.u32 %v429, 7
    %v431 = vsub.s32 0, %v430
    %v432 = vrot.slane %v332, %v431
    %v450 = vunpack.c.l.b16 %v315
    %v451 = vunpack.c.l.b16 %v316
    %v452 = vunpack.c.l.b16 %v317
    %v453 = vunpack.c.l.b16 %v318
    %v454 = vunpack.c.l.b16 %v319
    %v455 = vunpack.c.l.b16 %v320
    %v456 = vunpack.c.l.b16 %v321
    %v457 = vunpack.c.l.b16 %v322
    %v458 = vunpack.c.l.b16 %v323
    %v459 = vunpack.c.l.b16 %v324
    %v460 = vunpack.c.l.b16 %v325
    %v461 = vunpack.c.l.b16 %v326
    %v462 = vunpack.c.l.b16 %v327
    %v463 = vunpack.c.l.b16 %v328
    %v464 = vunpack.c.l.b16 %v329
    %v465 = vunpack.c.l.b16 %v330
    %v466 = vpack.c.b16 %v451, %v450
    %v467 = vpack.c.b16 %v453, %v452
    %v468 = vpack.c.b16 %v455, %v454
    %v469 = vpack.c.b16 %v457, %v456
    %v470 = vpack.c.b16 %v459, %v458
    %v471 = vpack.c.b16 %v461, %v460
    %v472 = vpack.c.b16 %v463, %v462
    %v473 = vpack.c.b16 %v465, %v464
    %482 = vmatprep.subr.bf16.mxu0 0
    %483 = vmatpush1.bf16.msra.mxu0 %v466
    %484 = vmatprep.subr.bf16.mxu0 0
    %485 = vmatpush1.bf16.msra.mxu0 %v467
    %486 = vmatprep.subr.bf16.mxu0 0
    %487 = vmatpush1.bf16.msra.mxu0 %v468
    %488 = vmatprep.subr.bf16.mxu0 0
    %489 = vmatpush1.bf16.msra.mxu0 %v469
    %490 = vmatprep.subr.bf16.mxu0 0
    %491 = vmatpush1.bf16.msra.mxu0 %v470
    %492 = vmatprep.subr.bf16.mxu0 0
    %493 = vmatpush1.bf16.msra.mxu0 %v471
    %494 = vmatprep.subr.bf16.mxu0 0
    %495 = vmatpush1.bf16.msra.mxu0 %v472
    %496 = vmatprep.subr.bf16.mxu0 0
    %497 = vmatpush1.bf16.msra.mxu0 %v473
    %498 = vmatprep.subr.bf16.mxu0 0
    %499 = vmatpush1.bf16.msra.mxu0 0
    %500 = vmatprep.subr.bf16.mxu0 0
    %501 = vmatpush1.bf16.msra.mxu0 0
    %502 = vmatprep.subr.bf16.mxu0 0
    %503 = vmatpush1.bf16.msra.mxu0 0
    %504 = vmatprep.subr.bf16.mxu0 0
    %505 = vmatpush1.bf16.msra.mxu0 0
    %506 = vmatprep.subr.bf16.mxu0 0
    %507 = vmatpush1.bf16.msra.mxu0 0
    %508 = vmatprep.subr.bf16.mxu0 0
    %509 = vmatpush1.bf16.msra.mxu0 0
    %510 = vmatprep.subr.bf16.mxu0 0
    %511 = vmatpush1.bf16.msra.mxu0 0
    %512 = vmatprep.subr.bf16.mxu0 0
    %513 = vmatpush1.bf16.msra.mxu0 0
    %514 = vmatprep.mubr.bf16.mxu0 0
    %515 = vmatmul.mubr.bf16.gmra.mrb[0].mxu0 %v289
    %v516 = vpop.f32.mrb[0].mxu0
    %v517 = vadd.f32 %v432, %v516
    %v518 = vpop.f32.mrb[0].mxu0
    %v519 = vpop.f32.mrb[0].mxu0
    %v520 = vpop.f32.mrb[0].mxu0
    %521 = vdwg.mxu0
    %v522 = vtanh.pop %v517
    %v523 = vmul.f32 %v522, 0.25
    %v524 = vmul.f32 %v523, 1.442695
    %v525 = vpow.pop %v524
    %v526 = vmul.f32 %v525, %v294
    %v527 = vadd.f32 %v427, %v526
    %v528 = vpack.c.bf16 %v527, %v527
    %529 = vst [vmem:[#allocation2] sm:$0xff] 0.0
    %v530 = vld [vmem:[%s1] sm:$0xff]
    %vm531 = vcmask 31744
    %532 = vst.msk [vmem:[#allocation2] sm:$0xff] %vm531, %v530
    %v533 = vld [vmem:[#allocation2] sm:$0xff]
    %v534 = vpack.c.bf16 %v533, %v533
    %s535 = scalar_lea.vmem [#allocation5], 256
    %v536 = vld [vmem:[%s535] sm:$0xf]
    %v537 = vld [vmem:[%s535 + $0x4] sm:$0xf]
    %v538 = vld [vmem:[%s535 + $0x8] sm:$0xf]
    %v539 = vld [vmem:[%s535 + $0xc] sm:$0xf]
    %v540 = vld [vmem:[%s535 + $0x10] sm:$0xf]
    %v541 = vld [vmem:[%s535 + $0x14] sm:$0xf]
    %v542 = vld [vmem:[%s535 + $0x18] sm:$0xf]
    %v543 = vld [vmem:[%s535 + $0x1c] sm:$0xf]
    %v544 = vld [vmem:[%s535 + $0x20] sm:$0xf]
    %v545 = vld [vmem:[%s535 + $0x24] sm:$0xf]
    %v546 = vld [vmem:[%s535 + $0x28] sm:$0xf]
    %v547 = vld [vmem:[%s535 + $0x2c] sm:$0xf]
    %v548 = vld [vmem:[%s535 + $0x30] sm:$0xf]
    %v549 = vld [vmem:[%s535 + $0x34] sm:$0xf]
    %v550 = vld [vmem:[%s535 + $0x38] sm:$0xf]
    %v551 = vld [vmem:[%s535 + $0x3c] sm:$0xf]
    %s552 = scalar_lea.vmem [#allocation5], 320
    %v553 = vld [vmem:[%s552] sm:$0xf]
    %v554 = vld [vmem:[%s552 + $0x4] sm:$0xf]
    %v555 = vld [vmem:[%s552 + $0x8] sm:$0xf]
    %v556 = vld [vmem:[%s552 + $0xc] sm:$0xf]
    %v557 = vld [vmem:[%s552 + $0x10] sm:$0xf]
    %v558 = vld [vmem:[%s552 + $0x14] sm:$0xf]
    %v559 = vld [vmem:[%s552 + $0x18] sm:$0xf]
    %v560 = vld [vmem:[%s552 + $0x1c] sm:$0xf]
    %v561 = vld [vmem:[%s552 + $0x20] sm:$0xf]
    %v562 = vld [vmem:[%s552 + $0x24] sm:$0xf]
    %v563 = vld [vmem:[%s552 + $0x28] sm:$0xf]
    %v564 = vld [vmem:[%s552 + $0x2c] sm:$0xf]
    %v565 = vld [vmem:[%s552 + $0x30] sm:$0xf]
    %v566 = vld [vmem:[%s552 + $0x34] sm:$0xf]
    %v567 = vld [vmem:[%s552 + $0x38] sm:$0xf]
    %v568 = vld [vmem:[%s552 + $0x3c] sm:$0xf]
    %s569 = scalar_lea.vmem %s7, 4
    %v570 = vld [vmem:[%s569] sm:$0x1]
    %v587 = vunpack.c.l.b16 %v553
    %v588 = vunpack.c.l.b16 %v554
    %v589 = vunpack.c.l.b16 %v555
    %v590 = vunpack.c.l.b16 %v556
    %v591 = vunpack.c.l.b16 %v557
    %v592 = vunpack.c.l.b16 %v558
    %v593 = vunpack.c.l.b16 %v559
    %v594 = vunpack.c.l.b16 %v560
    %v595 = vunpack.c.l.b16 %v561
    %v596 = vunpack.c.l.b16 %v562
    %v597 = vunpack.c.l.b16 %v563
    %v598 = vunpack.c.l.b16 %v564
    %v599 = vunpack.c.l.b16 %v565
    %v600 = vunpack.c.l.b16 %v566
    %v601 = vunpack.c.l.b16 %v567
    %v602 = vunpack.c.l.b16 %v568
    %v603 = vpack.c.b16 %v588, %v587
    %v604 = vpack.c.b16 %v590, %v589
    %v605 = vpack.c.b16 %v592, %v591
    %v606 = vpack.c.b16 %v594, %v593
    %v607 = vpack.c.b16 %v596, %v595
    %v608 = vpack.c.b16 %v598, %v597
    %v609 = vpack.c.b16 %v600, %v599
    %v610 = vpack.c.b16 %v602, %v601
    %619 = vmatprep.subr.bf16.mxu0 0
    %620 = vmatpush1.bf16.msra.mxu0 %v603
    %621 = vmatprep.subr.bf16.mxu0 0
    %622 = vmatpush1.bf16.msra.mxu0 %v604
    %623 = vmatprep.subr.bf16.mxu0 0
    %624 = vmatpush1.bf16.msra.mxu0 %v605
    %625 = vmatprep.subr.bf16.mxu0 0
    %626 = vmatpush1.bf16.msra.mxu0 %v606
    %627 = vmatprep.subr.bf16.mxu0 0
    %628 = vmatpush1.bf16.msra.mxu0 %v607
    %629 = vmatprep.subr.bf16.mxu0 0
    %630 = vmatpush1.bf16.msra.mxu0 %v608
    %631 = vmatprep.subr.bf16.mxu0 0
    %632 = vmatpush1.bf16.msra.mxu0 %v609
    %633 = vmatprep.subr.bf16.mxu0 0
    %634 = vmatpush1.bf16.msra.mxu0 %v610
    %635 = vmatprep.subr.bf16.mxu0 0
    %636 = vmatpush1.bf16.msra.mxu0 0
    %637 = vmatprep.subr.bf16.mxu0 0
    %638 = vmatpush1.bf16.msra.mxu0 0
    %639 = vmatprep.subr.bf16.mxu0 0
    %640 = vmatpush1.bf16.msra.mxu0 0
    %641 = vmatprep.subr.bf16.mxu0 0
    %642 = vmatpush1.bf16.msra.mxu0 0
    %643 = vmatprep.subr.bf16.mxu0 0
    %644 = vmatpush1.bf16.msra.mxu0 0
    %645 = vmatprep.subr.bf16.mxu0 0
    %646 = vmatpush1.bf16.msra.mxu0 0
    %647 = vmatprep.subr.bf16.mxu0 0
    %648 = vmatpush1.bf16.msra.mxu0 0
    %649 = vmatprep.subr.bf16.mxu0 0
    %650 = vmatpush1.bf16.msra.mxu0 0
    %651 = vmatprep.mubr.bf16.mxu0 0
    %652 = vmatmul.mubr.bf16.gmra.mrb[0].mxu0 %v534
    %v653 = vpop.f32.mrb[0].mxu0
    %v654 = vadd.f32 0.0, %v653
    %v655 = vpop.f32.mrb[0].mxu0
    %v656 = vpop.f32.mrb[0].mxu0
    %v657 = vpop.f32.mrb[0].mxu0
    %658 = vdwg.mxu0
    %v675 = vunpack.c.l.b16 %v536
    %v676 = vunpack.c.l.b16 %v537
    %v677 = vunpack.c.l.b16 %v538
    %v678 = vunpack.c.l.b16 %v539
    %v679 = vunpack.c.l.b16 %v540
    %v680 = vunpack.c.l.b16 %v541
    %v681 = vunpack.c.l.b16 %v542
    %v682 = vunpack.c.l.b16 %v543
    %v683 = vunpack.c.l.b16 %v544
    %v684 = vunpack.c.l.b16 %v545
    %v685 = vunpack.c.l.b16 %v546
    %v686 = vunpack.c.l.b16 %v547
    %v687 = vunpack.c.l.b16 %v548
    %v688 = vunpack.c.l.b16 %v549
    %v689 = vunpack.c.l.b16 %v550
    %v690 = vunpack.c.l.b16 %v551
    %v691 = vpack.c.b16 %v676, %v675
    %v692 = vpack.c.b16 %v678, %v677
    %v693 = vpack.c.b16 %v680, %v679
    %v694 = vpack.c.b16 %v682, %v681
    %v695 = vpack.c.b16 %v684, %v683
    %v696 = vpack.c.b16 %v686, %v685
    %v697 = vpack.c.b16 %v688, %v687
    %v698 = vpack.c.b16 %v690, %v689
    %707 = vmatprep.subr.bf16.mxu0 0
    %708 = vmatpush1.bf16.msra.mxu0 %v691
    %709 = vmatprep.subr.bf16.mxu0 0
    %710 = vmatpush1.bf16.msra.mxu0 %v692
    %711 = vmatprep.subr.bf16.mxu0 0
    %712 = vmatpush1.bf16.msra.mxu0 %v693
    %713 = vmatprep.subr.bf16.mxu0 0
    %714 = vmatpush1.bf16.msra.mxu0 %v694
    %715 = vmatprep.subr.bf16.mxu0 0
    %716 = vmatpush1.bf16.msra.mxu0 %v695
    %717 = vmatprep.subr.bf16.mxu0 0
    %718 = vmatpush1.bf16.msra.mxu0 %v696
    %719 = vmatprep.subr.bf16.mxu0 0
    %720 = vmatpush1.bf16.msra.mxu0 %v697
    %721 = vmatprep.subr.bf16.mxu0 0
    %722 = vmatpush1.bf16.msra.mxu0 %v698
    %723 = vmatprep.subr.bf16.mxu0 0
    %724 = vmatpush1.bf16.msra.mxu0 0
    %725 = vmatprep.subr.bf16.mxu0 0
    %726 = vmatpush1.bf16.msra.mxu0 0
    %727 = vmatprep.subr.bf16.mxu0 0
    %728 = vmatpush1.bf16.msra.mxu0 0
    %729 = vmatprep.subr.bf16.mxu0 0
    %730 = vmatpush1.bf16.msra.mxu0 0
    %731 = vmatprep.subr.bf16.mxu0 0
    %732 = vmatpush1.bf16.msra.mxu0 0
    %733 = vmatprep.subr.bf16.mxu0 0
    %734 = vmatpush1.bf16.msra.mxu0 0
    %735 = vmatprep.subr.bf16.mxu0 0
    %736 = vmatpush1.bf16.msra.mxu0 0
    %737 = vmatprep.subr.bf16.mxu0 0
    %738 = vmatpush1.bf16.msra.mxu0 0
    %739 = vmatprep.mubr.bf16.mxu0 0
    %740 = vmatmul.mubr.bf16.gmra.mrb[0].mxu0 %v528
    %v741 = vpop.f32.mrb[0].mxu0
    %v742 = vadd.f32 %v654, %v741
    %v743 = vpop.f32.mrb[0].mxu0
    %v744 = vpop.f32.mrb[0].mxu0
    %v745 = vpop.f32.mrb[0].mxu0
    %746 = vdwg.mxu0
    %v748 = vlaneseq
    %v749 = vshrl.u32 %v748, 7
    %v750 = vsub.s32 0, %v749
    %v751 = vrot.slane %v570, %v750
    %v753 = vadd.f32 %v742, %v751
    %v754 = vtanh.pop %v753
    %v755 = vpack.c.bf16 %v754, %v754
    %s756 = scalar_lea.vmem [#allocation5], 384
    %v757 = vld [vmem:[%s756] sm:$0xf]
    %v758 = vld [vmem:[%s756 + $0x4] sm:$0xf]
    %v759 = vld [vmem:[%s756 + $0x8] sm:$0xf]
    %v760 = vld [vmem:[%s756 + $0xc] sm:$0xf]
    %v761 = vld [vmem:[%s756 + $0x10] sm:$0xf]
    %v762 = vld [vmem:[%s756 + $0x14] sm:$0xf]
    %v763 = vld [vmem:[%s756 + $0x18] sm:$0xf]
    %v764 = vld [vmem:[%s756 + $0x1c] sm:$0xf]
    %v765 = vld [vmem:[%s756 + $0x20] sm:$0xf]
    %v766 = vld [vmem:[%s756 + $0x24] sm:$0xf]
    %v767 = vld [vmem:[%s756 + $0x28] sm:$0xf]
    %v768 = vld [vmem:[%s756 + $0x2c] sm:$0xf]
    %v769 = vld [vmem:[%s756 + $0x30] sm:$0xf]
    %v770 = vld [vmem:[%s756 + $0x34] sm:$0xf]
    %v771 = vld [vmem:[%s756 + $0x38] sm:$0xf]
    %v772 = vld [vmem:[%s756 + $0x3c] sm:$0xf]
    %s773 = scalar_lea.vmem %s7, 5
    %v774 = vld [vmem:[%s773] sm:$0x1]
    %v776 = vlaneseq
    %v777 = vshrl.u32 %v776, 7
    %v778 = vsub.s32 0, %v777
    %v779 = vrot.slane %v774, %v778
    %v797 = vunpack.c.l.b16 %v757
    %v798 = vunpack.c.l.b16 %v758
    %v799 = vunpack.c.l.b16 %v759
    %v800 = vunpack.c.l.b16 %v760
    %v801 = vunpack.c.l.b16 %v761
    %v802 = vunpack.c.l.b16 %v762
    %v803 = vunpack.c.l.b16 %v763
    %v804 = vunpack.c.l.b16 %v764
    %v805 = vunpack.c.l.b16 %v765
    %v806 = vunpack.c.l.b16 %v766
    %v807 = vunpack.c.l.b16 %v767
    %v808 = vunpack.c.l.b16 %v768
    %v809 = vunpack.c.l.b16 %v769
    %v810 = vunpack.c.l.b16 %v770
    %v811 = vunpack.c.l.b16 %v771
    %v812 = vunpack.c.l.b16 %v772
    %v813 = vpack.c.b16 %v798, %v797
    %v814 = vpack.c.b16 %v800, %v799
    %v815 = vpack.c.b16 %v802, %v801
    %v816 = vpack.c.b16 %v804, %v803
    %v817 = vpack.c.b16 %v806, %v805
    %v818 = vpack.c.b16 %v808, %v807
    %v819 = vpack.c.b16 %v810, %v809
    %v820 = vpack.c.b16 %v812, %v811
    %829 = vmatprep.subr.bf16.mxu0 0
    %830 = vmatpush1.bf16.msra.mxu0 %v813
    %831 = vmatprep.subr.bf16.mxu0 0
    %832 = vmatpush1.bf16.msra.mxu0 %v814
    %833 = vmatprep.subr.bf16.mxu0 0
    %834 = vmatpush1.bf16.msra.mxu0 %v815
    %835 = vmatprep.subr.bf16.mxu0 0
    %836 = vmatpush1.bf16.msra.mxu0 %v816
    %837 = vmatprep.subr.bf16.mxu0 0
    %838 = vmatpush1.bf16.msra.mxu0 %v817
    %839 = vmatprep.subr.bf16.mxu0 0
    %840 = vmatpush1.bf16.msra.mxu0 %v818
    %841 = vmatprep.subr.bf16.mxu0 0
    %842 = vmatpush1.bf16.msra.mxu0 %v819
    %843 = vmatprep.subr.bf16.mxu0 0
    %844 = vmatpush1.bf16.msra.mxu0 %v820
    %845 = vmatprep.subr.bf16.mxu0 0
    %846 = vmatpush1.bf16.msra.mxu0 0
    %847 = vmatprep.subr.bf16.mxu0 0
    %848 = vmatpush1.bf16.msra.mxu0 0
    %849 = vmatprep.subr.bf16.mxu0 0
    %850 = vmatpush1.bf16.msra.mxu0 0
    %851 = vmatprep.subr.bf16.mxu0 0
    %852 = vmatpush1.bf16.msra.mxu0 0
    %853 = vmatprep.subr.bf16.mxu0 0
    %854 = vmatpush1.bf16.msra.mxu0 0
    %855 = vmatprep.subr.bf16.mxu0 0
    %856 = vmatpush1.bf16.msra.mxu0 0
    %857 = vmatprep.subr.bf16.mxu0 0
    %858 = vmatpush1.bf16.msra.mxu0 0
    %859 = vmatprep.subr.bf16.mxu0 0
    %860 = vmatpush1.bf16.msra.mxu0 0
    %861 = vmatprep.mubr.bf16.mxu0 0
    %862 = vmatmul.mubr.bf16.gmra.mrb[0].mxu0 %v755
    %v863 = vpop.f32.mrb[0].mxu0
    %v864 = vadd.f32 %v779, %v863
    %v865 = vpop.f32.mrb[0].mxu0
    %v866 = vpop.f32.mrb[0].mxu0
    %v867 = vpop.f32.mrb[0].mxu0
    %868 = vdwg.mxu0
    %v869 = vtanh.pop %v864
    %v870 = vpack.c.bf16 %v869, %v869
    %871 = vst [vmem:[#allocation2] sm:$0xff] 0.0
    %v872 = vld [vmem:[#allocation3] sm:$0xff]
    %873 = vst.msk [vmem:[#allocation2] sm:$0xff] %vm292, %v872
    %v874 = vld [vmem:[#allocation2] sm:$0xff]
    %s875 = scalar_lea.vmem [#allocation5], 448
    %v876 = vld [vmem:[%s875] sm:$0xf]
    %v877 = vld [vmem:[%s875 + $0x4] sm:$0xf]
    %v878 = vld [vmem:[%s875 + $0x8] sm:$0xf]
    %v879 = vld [vmem:[%s875 + $0xc] sm:$0xf]
    %v880 = vld [vmem:[%s875 + $0x10] sm:$0xf]
    %v881 = vld [vmem:[%s875 + $0x14] sm:$0xf]
    %v882 = vld [vmem:[%s875 + $0x18] sm:$0xf]
    %v883 = vld [vmem:[%s875 + $0x1c] sm:$0xf]
    %v884 = vld [vmem:[%s875 + $0x20] sm:$0xf]
    %v885 = vld [vmem:[%s875 + $0x24] sm:$0xf]
    %v886 = vld [vmem:[%s875 + $0x28] sm:$0xf]
    %v887 = vld [vmem:[%s875 + $0x2c] sm:$0xf]
    %v888 = vld [vmem:[%s875 + $0x30] sm:$0xf]
    %v889 = vld [vmem:[%s875 + $0x34] sm:$0xf]
    %v890 = vld [vmem:[%s875 + $0x38] sm:$0xf]
    %v891 = vld [vmem:[%s875 + $0x3c] sm:$0xf]
    %s892 = scalar_lea.vmem %s7, 6
    %v893 = vld [vmem:[%s892] sm:$0x1]
    %s894 = scalar_lea.vmem [#allocation5], 512
    %v895 = vld [vmem:[%s894] sm:$0xf]
    %v896 = vld [vmem:[%s894 + $0x4] sm:$0xf]
    %v897 = vld [vmem:[%s894 + $0x8] sm:$0xf]
    %v898 = vld [vmem:[%s894 + $0xc] sm:$0xf]
    %v899 = vld [vmem:[%s894 + $0x10] sm:$0xf]
    %v900 = vld [vmem:[%s894 + $0x14] sm:$0xf]
    %v901 = vld [vmem:[%s894 + $0x18] sm:$0xf]
    %v902 = vld [vmem:[%s894 + $0x1c] sm:$0xf]
    %v903 = vld [vmem:[%s894 + $0x20] sm:$0xf]
    %v904 = vld [vmem:[%s894 + $0x24] sm:$0xf]
    %v905 = vld [vmem:[%s894 + $0x28] sm:$0xf]
    %v906 = vld [vmem:[%s894 + $0x2c] sm:$0xf]
    %v907 = vld [vmem:[%s894 + $0x30] sm:$0xf]
    %v908 = vld [vmem:[%s894 + $0x34] sm:$0xf]
    %v909 = vld [vmem:[%s894 + $0x38] sm:$0xf]
    %v910 = vld [vmem:[%s894 + $0x3c] sm:$0xf]
    %s911 = scalar_lea.vmem %s7, 7
    %v912 = vld [vmem:[%s911] sm:$0x1]
    %v914 = vlaneseq
    %v915 = vshrl.u32 %v914, 7
    %v916 = vsub.s32 0, %v915
    %v917 = vrot.slane %v893, %v916
    %v935 = vunpack.c.l.b16 %v876
    %v936 = vunpack.c.l.b16 %v877
    %v937 = vunpack.c.l.b16 %v878
    %v938 = vunpack.c.l.b16 %v879
    %v939 = vunpack.c.l.b16 %v880
    %v940 = vunpack.c.l.b16 %v881
    %v941 = vunpack.c.l.b16 %v882
    %v942 = vunpack.c.l.b16 %v883
    %v943 = vunpack.c.l.b16 %v884
    %v944 = vunpack.c.l.b16 %v885
    %v945 = vunpack.c.l.b16 %v886
    %v946 = vunpack.c.l.b16 %v887
    %v947 = vunpack.c.l.b16 %v888
    %v948 = vunpack.c.l.b16 %v889
    %v949 = vunpack.c.l.b16 %v890
    %v950 = vunpack.c.l.b16 %v891
    %v951 = vpack.c.b16 %v936, %v935
    %v952 = vpack.c.b16 %v938, %v937
    %v953 = vpack.c.b16 %v940, %v939
    %v954 = vpack.c.b16 %v942, %v941
    %v955 = vpack.c.b16 %v944, %v943
    %v956 = vpack.c.b16 %v946, %v945
    %v957 = vpack.c.b16 %v948, %v947
    %v958 = vpack.c.b16 %v950, %v949
    %967 = vmatprep.subr.bf16.mxu0 0
    %968 = vmatpush1.bf16.msra.mxu0 %v951
    %969 = vmatprep.subr.bf16.mxu0 0
    %970 = vmatpush1.bf16.msra.mxu0 %v952
    %971 = vmatprep.subr.bf16.mxu0 0
    %972 = vmatpush1.bf16.msra.mxu0 %v953
    %973 = vmatprep.subr.bf16.mxu0 0
    %974 = vmatpush1.bf16.msra.mxu0 %v954
    %975 = vmatprep.subr.bf16.mxu0 0
    %976 = vmatpush1.bf16.msra.mxu0 %v955
    %977 = vmatprep.subr.bf16.mxu0 0
    %978 = vmatpush1.bf16.msra.mxu0 %v956
    %979 = vmatprep.subr.bf16.mxu0 0
    %980 = vmatpush1.bf16.msra.mxu0 %v957
    %981 = vmatprep.subr.bf16.mxu0 0
    %982 = vmatpush1.bf16.msra.mxu0 %v958
    %983 = vmatprep.subr.bf16.mxu0 0
    %984 = vmatpush1.bf16.msra.mxu0 0
    %985 = vmatprep.subr.bf16.mxu0 0
    %986 = vmatpush1.bf16.msra.mxu0 0
    %987 = vmatprep.subr.bf16.mxu0 0
    %988 = vmatpush1.bf16.msra.mxu0 0
    %989 = vmatprep.subr.bf16.mxu0 0
    %990 = vmatpush1.bf16.msra.mxu0 0
    %991 = vmatprep.subr.bf16.mxu0 0
    %992 = vmatpush1.bf16.msra.mxu0 0
    %993 = vmatprep.subr.bf16.mxu0 0
    %994 = vmatpush1.bf16.msra.mxu0 0
    %995 = vmatprep.subr.bf16.mxu0 0
    %996 = vmatpush1.bf16.msra.mxu0 0
    %997 = vmatprep.subr.bf16.mxu0 0
    %998 = vmatpush1.bf16.msra.mxu0 0
    %999 = vmatprep.mubr.bf16.mxu0 0
    %1000 = vmatmul.mubr.bf16.gmra.mrb[0].mxu0 %v870
    %v1001 = vpop.f32.mrb[0].mxu0
    %v1002 = vadd.f32 %v917, %v1001
    %v1003 = vpop.f32.mrb[0].mxu0
    %v1004 = vpop.f32.mrb[0].mxu0
    %v1005 = vpop.f32.mrb[0].mxu0
    %1006 = vdwg.mxu0
    %v1007 = vtanh.pop %v1002
    %v1009 = vlaneseq
    %v1010 = vshrl.u32 %v1009, 7
    %v1011 = vsub.s32 0, %v1010
    %v1012 = vrot.slane %v912, %v1011
    %v1030 = vunpack.c.l.b16 %v895
    %v1031 = vunpack.c.l.b16 %v896
    %v1032 = vunpack.c.l.b16 %v897
    %v1033 = vunpack.c.l.b16 %v898
    %v1034 = vunpack.c.l.b16 %v899
    %v1035 = vunpack.c.l.b16 %v900
    %v1036 = vunpack.c.l.b16 %v901
    %v1037 = vunpack.c.l.b16 %v902
    %v1038 = vunpack.c.l.b16 %v903
    %v1039 = vunpack.c.l.b16 %v904
    %v1040 = vunpack.c.l.b16 %v905
    %v1041 = vunpack.c.l.b16 %v906
    %v1042 = vunpack.c.l.b16 %v907
    %v1043 = vunpack.c.l.b16 %v908
    %v1044 = vunpack.c.l.b16 %v909
    %v1045 = vunpack.c.l.b16 %v910
    %v1046 = vpack.c.b16 %v1031, %v1030
    %v1047 = vpack.c.b16 %v1033, %v1032
    %v1048 = vpack.c.b16 %v1035, %v1034
    %v1049 = vpack.c.b16 %v1037, %v1036
    %v1050 = vpack.c.b16 %v1039, %v1038
    %v1051 = vpack.c.b16 %v1041, %v1040
    %v1052 = vpack.c.b16 %v1043, %v1042
    %v1053 = vpack.c.b16 %v1045, %v1044
    %1062 = vmatprep.subr.bf16.mxu0 0
    %1063 = vmatpush1.bf16.msra.mxu0 %v1046
    %1064 = vmatprep.subr.bf16.mxu0 0
    %1065 = vmatpush1.bf16.msra.mxu0 %v1047
    %1066 = vmatprep.subr.bf16.mxu0 0
    %1067 = vmatpush1.bf16.msra.mxu0 %v1048
    %1068 = vmatprep.subr.bf16.mxu0 0
    %1069 = vmatpush1.bf16.msra.mxu0 %v1049
    %1070 = vmatprep.subr.bf16.mxu0 0
    %1071 = vmatpush1.bf16.msra.mxu0 %v1050
    %1072 = vmatprep.subr.bf16.mxu0 0
    %1073 = vmatpush1.bf16.msra.mxu0 %v1051
    %1074 = vmatprep.subr.bf16.mxu0 0
    %1075 = vmatpush1.bf16.msra.mxu0 %v1052
    %1076 = vmatprep.subr.bf16.mxu0 0
    %1077 = vmatpush1.bf16.msra.mxu0 %v1053
    %1078 = vmatprep.subr.bf16.mxu0 0
    %1079 = vmatpush1.bf16.msra.mxu0 0
    %1080 = vmatprep.subr.bf16.mxu0 0
    %1081 = vmatpush1.bf16.msra.mxu0 0
    %1082 = vmatprep.subr.bf16.mxu0 0
    %1083 = vmatpush1.bf16.msra.mxu0 0
    %1084 = vmatprep.subr.bf16.mxu0 0
    %1085 = vmatpush1.bf16.msra.mxu0 0
    %1086 = vmatprep.subr.bf16.mxu0 0
    %1087 = vmatpush1.bf16.msra.mxu0 0
    %1088 = vmatprep.subr.bf16.mxu0 0
    %1089 = vmatpush1.bf16.msra.mxu0 0
    %1090 = vmatprep.subr.bf16.mxu0 0
    %1091 = vmatpush1.bf16.msra.mxu0 0
    %1092 = vmatprep.subr.bf16.mxu0 0
    %1093 = vmatpush1.bf16.msra.mxu0 0
    %1094 = vmatprep.mubr.bf16.mxu0 0
    %1095 = vmatmul.mubr.bf16.gmra.mrb[0].mxu0 %v870
    %v1096 = vpop.f32.mrb[0].mxu0
    %v1097 = vadd.f32 %v1012, %v1096
    %v1098 = vpop.f32.mrb[0].mxu0
    %v1099 = vpop.f32.mrb[0].mxu0
    %v1100 = vpop.f32.mrb[0].mxu0
    %1101 = vdwg.mxu0
    %v1102 = vtanh.pop %v1097
    %v1103 = vmul.f32 %v1102, 0.25
    %v1104 = vmul.f32 %v1103, 1.442695
    %v1105 = vpow.pop %v1104
    %v1106 = vmul.f32 %v1105, %v874
    %v1107 = vadd.f32 %v1007, %v1106
    %v1108 = vpack.c.bf16 %v1107, %v1107
    %s1109 = scalar_lea.vmem [#allocation5], 576
    %v1110 = vld [vmem:[%s1109] sm:$0xf]
    %v1111 = vld [vmem:[%s1109 + $0x4] sm:$0xf]
    %v1112 = vld [vmem:[%s1109 + $0x8] sm:$0xf]
    %v1113 = vld [vmem:[%s1109 + $0xc] sm:$0xf]
    %v1114 = vld [vmem:[%s1109 + $0x10] sm:$0xf]
    %v1115 = vld [vmem:[%s1109 + $0x14] sm:$0xf]
    %v1116 = vld [vmem:[%s1109 + $0x18] sm:$0xf]
    %v1117 = vld [vmem:[%s1109 + $0x1c] sm:$0xf]
    %v1118 = vld [vmem:[%s1109 + $0x20] sm:$0xf]
    %v1119 = vld [vmem:[%s1109 + $0x24] sm:$0xf]
    %v1120 = vld [vmem:[%s1109 + $0x28] sm:$0xf]
    %v1121 = vld [vmem:[%s1109 + $0x2c] sm:$0xf]
    %v1122 = vld [vmem:[%s1109 + $0x30] sm:$0xf]
    %v1123 = vld [vmem:[%s1109 + $0x34] sm:$0xf]
    %v1124 = vld [vmem:[%s1109 + $0x38] sm:$0xf]
    %v1125 = vld [vmem:[%s1109 + $0x3c] sm:$0xf]
    %s1126 = scalar_lea.vmem %s7, 8
    %v1127 = vld [vmem:[%s1126] sm:$0x1]
    %v1129 = vlaneseq
    %v1130 = vshrl.u32 %v1129, 7
    %v1131 = vsub.s32 0, %v1130
    %v1132 = vrot.slane %v1127, %v1131
    %v1150 = vunpack.c.l.b16 %v1110
    %v1151 = vunpack.c.l.b16 %v1111
    %v1152 = vunpack.c.l.b16 %v1112
    %v1153 = vunpack.c.l.b16 %v1113
    %v1154 = vunpack.c.l.b16 %v1114
    %v1155 = vunpack.c.l.b16 %v1115
    %v1156 = vunpack.c.l.b16 %v1116
    %v1157 = vunpack.c.l.b16 %v1117
    %v1158 = vunpack.c.l.b16 %v1118
    %v1159 = vunpack.c.l.b16 %v1119
    %v1160 = vunpack.c.l.b16 %v1120
    %v1161 = vunpack.c.l.b16 %v1121
    %v1162 = vunpack.c.l.b16 %v1122
    %v1163 = vunpack.c.l.b16 %v1123
    %v1164 = vunpack.c.l.b16 %v1124
    %v1165 = vunpack.c.l.b16 %v1125
    %v1166 = vpack.c.b16 %v1151, %v1150
    %v1167 = vpack.c.b16 %v1153, %v1152
    %v1168 = vpack.c.b16 %v1155, %v1154
    %v1169 = vpack.c.b16 %v1157, %v1156
    %v1170 = vpack.c.b16 %v1159, %v1158
    %v1171 = vpack.c.b16 %v1161, %v1160
    %v1172 = vpack.c.b16 %v1163, %v1162
    %v1173 = vpack.c.b16 %v1165, %v1164
    %1182 = vmatprep.subr.bf16.mxu0 0
    %1183 = vmatpush1.bf16.msra.mxu0 %v1166
    %1184 = vmatprep.subr.bf16.mxu0 0
    %1185 = vmatpush1.bf16.msra.mxu0 %v1167
    %1186 = vmatprep.subr.bf16.mxu0 0
    %1187 = vmatpush1.bf16.msra.mxu0 %v1168
    %1188 = vmatprep.subr.bf16.mxu0 0
    %1189 = vmatpush1.bf16.msra.mxu0 %v1169
    %1190 = vmatprep.subr.bf16.mxu0 0
    %1191 = vmatpush1.bf16.msra.mxu0 %v1170
    %1192 = vmatprep.subr.bf16.mxu0 0
    %1193 = vmatpush1.bf16.msra.mxu0 %v1171
    %1194 = vmatprep.subr.bf16.mxu0 0
    %1195 = vmatpush1.bf16.msra.mxu0 %v1172
    %1196 = vmatprep.subr.bf16.mxu0 0
    %1197 = vmatpush1.bf16.msra.mxu0 %v1173
    %1198 = vmatprep.subr.bf16.mxu0 0
    %1199 = vmatpush1.bf16.msra.mxu0 0
    %1200 = vmatprep.subr.bf16.mxu0 0
    %1201 = vmatpush1.bf16.msra.mxu0 0
    %1202 = vmatprep.subr.bf16.mxu0 0
    %1203 = vmatpush1.bf16.msra.mxu0 0
    %1204 = vmatprep.subr.bf16.mxu0 0
    %1205 = vmatpush1.bf16.msra.mxu0 0
    %1206 = vmatprep.subr.bf16.mxu0 0
    %1207 = vmatpush1.bf16.msra.mxu0 0
    %1208 = vmatprep.subr.bf16.mxu0 0
    %1209 = vmatpush1.bf16.msra.mxu0 0
    %1210 = vmatprep.subr.bf16.mxu0 0
    %1211 = vmatpush1.bf16.msra.mxu0 0
    %1212 = vmatprep.subr.bf16.mxu0 0
    %1213 = vmatpush1.bf16.msra.mxu0 0
    %1214 = vmatprep.mubr.bf16.mxu0 0
    %1215 = vmatmul.mubr.bf16.gmra.mrb[0].mxu0 %v1108
    %v1216 = vpop.f32.mrb[0].mxu0
    %v1217 = vadd.f32 %v1132, %v1216
    %v1218 = vpop.f32.mrb[0].mxu0
    %v1219 = vpop.f32.mrb[0].mxu0
    %v1220 = vpop.f32.mrb[0].mxu0
    %1221 = vdwg.mxu0
    %v1222 = vtanh.pop %v1217
    %v1223 = vpack.c.bf16 %v1222, %v1222
    %s1224 = scalar_lea.vmem [#allocation5], 640
    %v1225 = vld [vmem:[%s1224] sm:$0xf]
    %v1226 = vld [vmem:[%s1224 + $0x4] sm:$0xf]
    %v1227 = vld [vmem:[%s1224 + $0x8] sm:$0xf]
    %v1228 = vld [vmem:[%s1224 + $0xc] sm:$0xf]
    %v1229 = vld [vmem:[%s1224 + $0x10] sm:$0xf]
    %v1230 = vld [vmem:[%s1224 + $0x14] sm:$0xf]
    %v1231 = vld [vmem:[%s1224 + $0x18] sm:$0xf]
    %v1232 = vld [vmem:[%s1224 + $0x1c] sm:$0xf]
    %v1233 = vld [vmem:[%s1224 + $0x20] sm:$0xf]
    %v1234 = vld [vmem:[%s1224 + $0x24] sm:$0xf]
    %v1235 = vld [vmem:[%s1224 + $0x28] sm:$0xf]
    %v1236 = vld [vmem:[%s1224 + $0x2c] sm:$0xf]
    %v1237 = vld [vmem:[%s1224 + $0x30] sm:$0xf]
    %v1238 = vld [vmem:[%s1224 + $0x34] sm:$0xf]
    %v1239 = vld [vmem:[%s1224 + $0x38] sm:$0xf]
    %v1240 = vld [vmem:[%s1224 + $0x3c] sm:$0xf]
    %s1241 = scalar_lea.vmem %s7, 9
    %v1242 = vld [vmem:[%s1241] sm:$0x1]
    %v1244 = vlaneseq
    %v1245 = vshrl.u32 %v1244, 7
    %v1246 = vsub.s32 0, %v1245
    %v1247 = vrot.slane %v1242, %v1246
    %v1265 = vunpack.c.l.b16 %v1225
    %v1266 = vunpack.c.l.b16 %v1226
    %v1267 = vunpack.c.l.b16 %v1227
    %v1268 = vunpack.c.l.b16 %v1228
    %v1269 = vunpack.c.l.b16 %v1229
    %v1270 = vunpack.c.l.b16 %v1230
    %v1271 = vunpack.c.l.b16 %v1231
    %v1272 = vunpack.c.l.b16 %v1232
    %v1273 = vunpack.c.l.b16 %v1233
    %v1274 = vunpack.c.l.b16 %v1234
    %v1275 = vunpack.c.l.b16 %v1235
    %v1276 = vunpack.c.l.b16 %v1236
    %v1277 = vunpack.c.l.b16 %v1237
    %v1278 = vunpack.c.l.b16 %v1238
    %v1279 = vunpack.c.l.b16 %v1239
    %v1280 = vunpack.c.l.b16 %v1240
    %v1281 = vpack.c.b16 %v1266, %v1265
    %v1282 = vpack.c.b16 %v1268, %v1267
    %v1283 = vpack.c.b16 %v1270, %v1269
    %v1284 = vpack.c.b16 %v1272, %v1271
    %v1285 = vpack.c.b16 %v1274, %v1273
    %v1286 = vpack.c.b16 %v1276, %v1275
    %v1287 = vpack.c.b16 %v1278, %v1277
    %v1288 = vpack.c.b16 %v1280, %v1279
    %1297 = vmatprep.subr.bf16.mxu0 0
    %1298 = vmatpush1.bf16.msra.mxu0 %v1281
    %1299 = vmatprep.subr.bf16.mxu0 0
    %1300 = vmatpush1.bf16.msra.mxu0 %v1282
    %1301 = vmatprep.subr.bf16.mxu0 0
    %1302 = vmatpush1.bf16.msra.mxu0 %v1283
    %1303 = vmatprep.subr.bf16.mxu0 0
    %1304 = vmatpush1.bf16.msra.mxu0 %v1284
    %1305 = vmatprep.subr.bf16.mxu0 0
    %1306 = vmatpush1.bf16.msra.mxu0 %v1285
    %1307 = vmatprep.subr.bf16.mxu0 0
    %1308 = vmatpush1.bf16.msra.mxu0 %v1286
    %1309 = vmatprep.subr.bf16.mxu0 0
    %1310 = vmatpush1.bf16.msra.mxu0 %v1287
    %1311 = vmatprep.subr.bf16.mxu0 0
    %1312 = vmatpush1.bf16.msra.mxu0 %v1288
    %1313 = vmatprep.subr.bf16.mxu0 0
    %1314 = vmatpush1.bf16.msra.mxu0 0
    %1315 = vmatprep.subr.bf16.mxu0 0
    %1316 = vmatpush1.bf16.msra.mxu0 0
    %1317 = vmatprep.subr.bf16.mxu0 0
    %1318 = vmatpush1.bf16.msra.mxu0 0
    %1319 = vmatprep.subr.bf16.mxu0 0
    %1320 = vmatpush1.bf16.msra.mxu0 0
    %1321 = vmatprep.subr.bf16.mxu0 0
    %1322 = vmatpush1.bf16.msra.mxu0 0
    %1323 = vmatprep.subr.bf16.mxu0 0
    %1324 = vmatpush1.bf16.msra.mxu0 0
    %1325 = vmatprep.subr.bf16.mxu0 0
    %1326 = vmatpush1.bf16.msra.mxu0 0
    %1327 = vmatprep.subr.bf16.mxu0 0
    %1328 = vmatpush1.bf16.msra.mxu0 0
    %1329 = vmatprep.mubr.bf16.mxu0 0
    %1330 = vmatmul.mubr.bf16.gmra.mrb[0].mxu0 %v1223
    %v1331 = vpop.f32.mrb[0].mxu0
    %v1332 = vadd.f32 %v1247, %v1331
    %v1333 = vpop.f32.mrb[0].mxu0
    %v1334 = vpop.f32.mrb[0].mxu0
    %v1335 = vpop.f32.mrb[0].mxu0
    %1336 = vdwg.mxu0
    %v1337 = vtanh.pop %v1332
    %v1338 = vpack.c.bf16 %v1337, %v1337
    %1339 = vst [vmem:[#allocation2] sm:$0xff] 0.0
    %v1340 = vld [vmem:[%s4] sm:$0xff]
    %1341 = vst.msk [vmem:[#allocation2] sm:$0xff] %vm58, %v1340
    %v1342 = vld [vmem:[#allocation2] sm:$0xff]
    %s1343 = scalar_lea.vmem [#allocation5], 704
    %v1344 = vld [vmem:[%s1343] sm:$0xf]
    %v1345 = vld [vmem:[%s1343 + $0x4] sm:$0xf]
    %v1346 = vld [vmem:[%s1343 + $0x8] sm:$0xf]
    %v1347 = vld [vmem:[%s1343 + $0xc] sm:$0xf]
    %v1348 = vld [vmem:[%s1343 + $0x10] sm:$0xf]
    %v1349 = vld [vmem:[%s1343 + $0x14] sm:$0xf]
    %v1350 = vld [vmem:[%s1343 + $0x18] sm:$0xf]
    %v1351 = vld [vmem:[%s1343 + $0x1c] sm:$0xf]
    %v1352 = vld [vmem:[%s1343 + $0x20] sm:$0xf]
    %v1353 = vld [vmem:[%s1343 + $0x24] sm:$0xf]
    %v1354 = vld [vmem:[%s1343 + $0x28] sm:$0xf]
    %v1355 = vld [vmem:[%s1343 + $0x2c] sm:$0xf]
    %v1356 = vld [vmem:[%s1343 + $0x30] sm:$0xf]
    %v1357 = vld [vmem:[%s1343 + $0x34] sm:$0xf]
    %v1358 = vld [vmem:[%s1343 + $0x38] sm:$0xf]
    %v1359 = vld [vmem:[%s1343 + $0x3c] sm:$0xf]
    %s1360 = scalar_lea.vmem %s7, 10
    %v1361 = vld [vmem:[%s1360] sm:$0x1]
    %s1362 = scalar_lea.vmem [#allocation5], 768
    %v1363 = vld [vmem:[%s1362] sm:$0xf]
    %v1364 = vld [vmem:[%s1362 + $0x4] sm:$0xf]
    %v1365 = vld [vmem:[%s1362 + $0x8] sm:$0xf]
    %v1366 = vld [vmem:[%s1362 + $0xc] sm:$0xf]
    %v1367 = vld [vmem:[%s1362 + $0x10] sm:$0xf]
    %v1368 = vld [vmem:[%s1362 + $0x14] sm:$0xf]
    %v1369 = vld [vmem:[%s1362 + $0x18] sm:$0xf]
    %v1370 = vld [vmem:[%s1362 + $0x1c] sm:$0xf]
    %v1371 = vld [vmem:[%s1362 + $0x20] sm:$0xf]
    %v1372 = vld [vmem:[%s1362 + $0x24] sm:$0xf]
    %v1373 = vld [vmem:[%s1362 + $0x28] sm:$0xf]
    %v1374 = vld [vmem:[%s1362 + $0x2c] sm:$0xf]
    %v1375 = vld [vmem:[%s1362 + $0x30] sm:$0xf]
    %v1376 = vld [vmem:[%s1362 + $0x34] sm:$0xf]
    %v1377 = vld [vmem:[%s1362 + $0x38] sm:$0xf]
    %v1378 = vld [vmem:[%s1362 + $0x3c] sm:$0xf]
    %s1379 = scalar_lea.vmem %s7, 11
    %v1380 = vld [vmem:[%s1379] sm:$0x1]
    %v1382 = vlaneseq
    %v1383 = vshrl.u32 %v1382, 7
    %v1384 = vsub.s32 0, %v1383
    %v1385 = vrot.slane %v1361, %v1384
    %v1403 = vunpack.c.l.b16 %v1344
    %v1404 = vunpack.c.l.b16 %v1345
    %v1405 = vunpack.c.l.b16 %v1346
    %v1406 = vunpack.c.l.b16 %v1347
    %v1407 = vunpack.c.l.b16 %v1348
    %v1408 = vunpack.c.l.b16 %v1349
    %v1409 = vunpack.c.l.b16 %v1350
    %v1410 = vunpack.c.l.b16 %v1351
    %v1411 = vunpack.c.l.b16 %v1352
    %v1412 = vunpack.c.l.b16 %v1353
    %v1413 = vunpack.c.l.b16 %v1354
    %v1414 = vunpack.c.l.b16 %v1355
    %v1415 = vunpack.c.l.b16 %v1356
    %v1416 = vunpack.c.l.b16 %v1357
    %v1417 = vunpack.c.l.b16 %v1358
    %v1418 = vunpack.c.l.b16 %v1359
    %v1419 = vpack.c.b16 %v1404, %v1403
    %v1420 = vpack.c.b16 %v1406, %v1405
    %v1421 = vpack.c.b16 %v1408, %v1407
    %v1422 = vpack.c.b16 %v1410, %v1409
    %v1423 = vpack.c.b16 %v1412, %v1411
    %v1424 = vpack.c.b16 %v1414, %v1413
    %v1425 = vpack.c.b16 %v1416, %v1415
    %v1426 = vpack.c.b16 %v1418, %v1417
    %1435 = vmatprep.subr.bf16.mxu0 0
    %1436 = vmatpush1.bf16.msra.mxu0 %v1419
    %1437 = vmatprep.subr.bf16.mxu0 0
    %1438 = vmatpush1.bf16.msra.mxu0 %v1420
    %1439 = vmatprep.subr.bf16.mxu0 0
    %1440 = vmatpush1.bf16.msra.mxu0 %v1421
    %1441 = vmatprep.subr.bf16.mxu0 0
    %1442 = vmatpush1.bf16.msra.mxu0 %v1422
    %1443 = vmatprep.subr.bf16.mxu0 0
    %1444 = vmatpush1.bf16.msra.mxu0 %v1423
    %1445 = vmatprep.subr.bf16.mxu0 0
    %1446 = vmatpush1.bf16.msra.mxu0 %v1424
    %1447 = vmatprep.subr.bf16.mxu0 0
    %1448 = vmatpush1.bf16.msra.mxu0 %v1425
    %1449 = vmatprep.subr.bf16.mxu0 0
    %1450 = vmatpush1.bf16.msra.mxu0 %v1426
    %1451 = vmatprep.subr.bf16.mxu0 0
    %1452 = vmatpush1.bf16.msra.mxu0 0
    %1453 = vmatprep.subr.bf16.mxu0 0
    %1454 = vmatpush1.bf16.msra.mxu0 0
    %1455 = vmatprep.subr.bf16.mxu0 0
    %1456 = vmatpush1.bf16.msra.mxu0 0
    %1457 = vmatprep.subr.bf16.mxu0 0
    %1458 = vmatpush1.bf16.msra.mxu0 0
    %1459 = vmatprep.subr.bf16.mxu0 0
    %1460 = vmatpush1.bf16.msra.mxu0 0
    %1461 = vmatprep.subr.bf16.mxu0 0
    %1462 = vmatpush1.bf16.msra.mxu0 0
    %1463 = vmatprep.subr.bf16.mxu0 0
    %1464 = vmatpush1.bf16.msra.mxu0 0
    %1465 = vmatprep.subr.bf16.mxu0 0
    %1466 = vmatpush1.bf16.msra.mxu0 0
    %1467 = vmatprep.mubr.bf16.mxu0 0
    %1468 = vmatmul.mubr.bf16.gmra.mrb[0].mxu0 %v1338
    %v1469 = vpop.f32.mrb[0].mxu0
    %v1470 = vadd.f32 %v1385, %v1469
    %v1471 = vpop.f32.mrb[0].mxu0
    %v1472 = vpop.f32.mrb[0].mxu0
    %v1473 = vpop.f32.mrb[0].mxu0
    %1474 = vdwg.mxu0
    %v1475 = vtanh.pop %v1470
    %v1477 = vlaneseq
    %v1478 = vshrl.u32 %v1477, 7
    %v1479 = vsub.s32 0, %v1478
    %v1480 = vrot.slane %v1380, %v1479
    %v1498 = vunpack.c.l.b16 %v1363
    %v1499 = vunpack.c.l.b16 %v1364
    %v1500 = vunpack.c.l.b16 %v1365
    %v1501 = vunpack.c.l.b16 %v1366
    %v1502 = vunpack.c.l.b16 %v1367
    %v1503 = vunpack.c.l.b16 %v1368
    %v1504 = vunpack.c.l.b16 %v1369
    %v1505 = vunpack.c.l.b16 %v1370
    %v1506 = vunpack.c.l.b16 %v1371
    %v1507 = vunpack.c.l.b16 %v1372
    %v1508 = vunpack.c.l.b16 %v1373
    %v1509 = vunpack.c.l.b16 %v1374
    %v1510 = vunpack.c.l.b16 %v1375
    %v1511 = vunpack.c.l.b16 %v1376
    %v1512 = vunpack.c.l.b16 %v1377
    %v1513 = vunpack.c.l.b16 %v1378
    %v1514 = vpack.c.b16 %v1499, %v1498
    %v1515 = vpack.c.b16 %v1501, %v1500
    %v1516 = vpack.c.b16 %v1503, %v1502
    %v1517 = vpack.c.b16 %v1505, %v1504
    %v1518 = vpack.c.b16 %v1507, %v1506
    %v1519 = vpack.c.b16 %v1509, %v1508
    %v1520 = vpack.c.b16 %v1511, %v1510
    %v1521 = vpack.c.b16 %v1513, %v1512
    %1530 = vmatprep.subr.bf16.mxu0 0
    %1531 = vmatpush1.bf16.msra.mxu0 %v1514
    %1532 = vmatprep.subr.bf16.mxu0 0
    %1533 = vmatpush1.bf16.msra.mxu0 %v1515
    %1534 = vmatprep.subr.bf16.mxu0 0
    %1535 = vmatpush1.bf16.msra.mxu0 %v1516
    %1536 = vmatprep.subr.bf16.mxu0 0
    %1537 = vmatpush1.bf16.msra.mxu0 %v1517
    %1538 = vmatprep.subr.bf16.mxu0 0
    %1539 = vmatpush1.bf16.msra.mxu0 %v1518
    %1540 = vmatprep.subr.bf16.mxu0 0
    %1541 = vmatpush1.bf16.msra.mxu0 %v1519
    %1542 = vmatprep.subr.bf16.mxu0 0
    %1543 = vmatpush1.bf16.msra.mxu0 %v1520
    %1544 = vmatprep.subr.bf16.mxu0 0
    %1545 = vmatpush1.bf16.msra.mxu0 %v1521
    %1546 = vmatprep.subr.bf16.mxu0 0
    %1547 = vmatpush1.bf16.msra.mxu0 0
    %1548 = vmatprep.subr.bf16.mxu0 0
    %1549 = vmatpush1.bf16.msra.mxu0 0
    %1550 = vmatprep.subr.bf16.mxu0 0
    %1551 = vmatpush1.bf16.msra.mxu0 0
    %1552 = vmatprep.subr.bf16.mxu0 0
    %1553 = vmatpush1.bf16.msra.mxu0 0
    %1554 = vmatprep.subr.bf16.mxu0 0
    %1555 = vmatpush1.bf16.msra.mxu0 0
    %1556 = vmatprep.subr.bf16.mxu0 0
    %1557 = vmatpush1.bf16.msra.mxu0 0
    %1558 = vmatprep.subr.bf16.mxu0 0
    %1559 = vmatpush1.bf16.msra.mxu0 0
    %1560 = vmatprep.subr.bf16.mxu0 0
    %1561 = vmatpush1.bf16.msra.mxu0 0
    %1562 = vmatprep.mubr.bf16.mxu0 0
    %1563 = vmatmul.mubr.bf16.gmra.mrb[0].mxu0 %v1338
    %v1564 = vpop.f32.mrb[0].mxu0
    %v1565 = vadd.f32 %v1480, %v1564
    %v1566 = vpop.f32.mrb[0].mxu0
    %v1567 = vpop.f32.mrb[0].mxu0
    %v1568 = vpop.f32.mrb[0].mxu0
    %1569 = vdwg.mxu0
    %v1570 = vtanh.pop %v1565
    %v1571 = vmul.f32 %v1570, 0.25
    %v1572 = vmul.f32 %v1571, 1.442695
    %v1573 = vpow.pop %v1572
    %v1574 = vmul.f32 %v1573, %v1342
    %v1575 = vadd.f32 %v1475, %v1574
    %s1576 = scalar_lea.vmem [#allocation5], 832
    %v1577 = vld [vmem:[%s1576] sm:$0xf]
    %v1578 = vld [vmem:[%s1576 + $0x4] sm:$0xf]
    %v1579 = vld [vmem:[%s1576 + $0x8] sm:$0xf]
    %v1580 = vld [vmem:[%s1576 + $0xc] sm:$0xf]
    %v1581 = vld [vmem:[%s1576 + $0x10] sm:$0xf]
    %v1582 = vld [vmem:[%s1576 + $0x14] sm:$0xf]
    %v1583 = vld [vmem:[%s1576 + $0x18] sm:$0xf]
    %v1584 = vld [vmem:[%s1576 + $0x1c] sm:$0xf]
    %v1585 = vld [vmem:[%s1576 + $0x20] sm:$0xf]
    %v1586 = vld [vmem:[%s1576 + $0x24] sm:$0xf]
    %v1587 = vld [vmem:[%s1576 + $0x28] sm:$0xf]
    %v1588 = vld [vmem:[%s1576 + $0x2c] sm:$0xf]
    %v1589 = vld [vmem:[%s1576 + $0x30] sm:$0xf]
    %v1590 = vld [vmem:[%s1576 + $0x34] sm:$0xf]
    %v1591 = vld [vmem:[%s1576 + $0x38] sm:$0xf]
    %v1592 = vld [vmem:[%s1576 + $0x3c] sm:$0xf]
    %s1593 = scalar_lea.vmem %s7, 12
    %v1594 = vld [vmem:[%s1593] sm:$0x1]
    %v1596 = vlaneseq
    %v1597 = vshrl.u32 %v1596, 7
    %v1598 = vsub.s32 0, %v1597
    %v1599 = vrot.slane %v1594, %v1598
    %v1617 = vunpack.c.l.b16 %v1577
    %v1618 = vunpack.c.l.b16 %v1578
    %v1619 = vunpack.c.l.b16 %v1579
    %v1620 = vunpack.c.l.b16 %v1580
    %v1621 = vunpack.c.l.b16 %v1581
    %v1622 = vunpack.c.l.b16 %v1582
    %v1623 = vunpack.c.l.b16 %v1583
    %v1624 = vunpack.c.l.b16 %v1584
    %v1625 = vunpack.c.l.b16 %v1585
    %v1626 = vunpack.c.l.b16 %v1586
    %v1627 = vunpack.c.l.b16 %v1587
    %v1628 = vunpack.c.l.b16 %v1588
    %v1629 = vunpack.c.l.b16 %v1589
    %v1630 = vunpack.c.l.b16 %v1590
    %v1631 = vunpack.c.l.b16 %v1591
    %v1632 = vunpack.c.l.b16 %v1592
    %v1633 = vpack.c.b16 %v1618, %v1617
    %v1634 = vpack.c.b16 %v1620, %v1619
    %v1635 = vpack.c.b16 %v1622, %v1621
    %v1636 = vpack.c.b16 %v1624, %v1623
    %v1637 = vpack.c.b16 %v1626, %v1625
    %v1638 = vpack.c.b16 %v1628, %v1627
    %v1639 = vpack.c.b16 %v1630, %v1629
    %v1640 = vpack.c.b16 %v1632, %v1631
    %1649 = vmatprep.subr.bf16.mxu0 0
    %1650 = vmatpush1.bf16.msra.mxu0 %v1633
    %1651 = vmatprep.subr.bf16.mxu0 0
    %1652 = vmatpush1.bf16.msra.mxu0 %v1634
    %1653 = vmatprep.subr.bf16.mxu0 0
    %1654 = vmatpush1.bf16.msra.mxu0 %v1635
    %1655 = vmatprep.subr.bf16.mxu0 0
    %1656 = vmatpush1.bf16.msra.mxu0 %v1636
    %1657 = vmatprep.subr.bf16.mxu0 0
    %1658 = vmatpush1.bf16.msra.mxu0 %v1637
    %1659 = vmatprep.subr.bf16.mxu0 0
    %1660 = vmatpush1.bf16.msra.mxu0 %v1638
    %1661 = vmatprep.subr.bf16.mxu0 0
    %1662 = vmatpush1.bf16.msra.mxu0 %v1639
    %1663 = vmatprep.subr.bf16.mxu0 0
    %1664 = vmatpush1.bf16.msra.mxu0 %v1640
    %1665 = vmatprep.subr.bf16.mxu0 0
    %1666 = vmatpush1.bf16.msra.mxu0 0
    %1667 = vmatprep.subr.bf16.mxu0 0
    %1668 = vmatpush1.bf16.msra.mxu0 0
    %1669 = vmatprep.subr.bf16.mxu0 0
    %1670 = vmatpush1.bf16.msra.mxu0 0
    %1671 = vmatprep.subr.bf16.mxu0 0
    %1672 = vmatpush1.bf16.msra.mxu0 0
    %1673 = vmatprep.subr.bf16.mxu0 0
    %1674 = vmatpush1.bf16.msra.mxu0 0
    %1675 = vmatprep.subr.bf16.mxu0 0
    %1676 = vmatpush1.bf16.msra.mxu0 0
    %1677 = vmatprep.subr.bf16.mxu0 0
    %1678 = vmatpush1.bf16.msra.mxu0 0
    %1679 = vmatprep.subr.bf16.mxu0 0
    %1680 = vmatpush1.bf16.msra.mxu0 0
    %1681 = vmatprep.mubr.bf16.mxu0 0
    %1682 = vmatmul.mubr.bf16.gmra.mrb[0].mxu0 %v1108
    %v1683 = vpop.f32.mrb[0].mxu0
    %v1684 = vadd.f32 %v1599, %v1683
    %v1685 = vpop.f32.mrb[0].mxu0
    %v1686 = vpop.f32.mrb[0].mxu0
    %v1687 = vpop.f32.mrb[0].mxu0
    %1688 = vdwg.mxu0
    %v1689 = vtanh.pop %v1684
    %v1690 = vpack.c.bf16 %v1689, %v1689
    %s1691 = scalar_lea.vmem [#allocation5], 896
    %v1692 = vld [vmem:[%s1691] sm:$0xf]
    %v1693 = vld [vmem:[%s1691 + $0x4] sm:$0xf]
    %v1694 = vld [vmem:[%s1691 + $0x8] sm:$0xf]
    %v1695 = vld [vmem:[%s1691 + $0xc] sm:$0xf]
    %v1696 = vld [vmem:[%s1691 + $0x10] sm:$0xf]
    %v1697 = vld [vmem:[%s1691 + $0x14] sm:$0xf]
    %v1698 = vld [vmem:[%s1691 + $0x18] sm:$0xf]
    %v1699 = vld [vmem:[%s1691 + $0x1c] sm:$0xf]
    %v1700 = vld [vmem:[%s1691 + $0x20] sm:$0xf]
    %v1701 = vld [vmem:[%s1691 + $0x24] sm:$0xf]
    %v1702 = vld [vmem:[%s1691 + $0x28] sm:$0xf]
    %v1703 = vld [vmem:[%s1691 + $0x2c] sm:$0xf]
    %v1704 = vld [vmem:[%s1691 + $0x30] sm:$0xf]
    %v1705 = vld [vmem:[%s1691 + $0x34] sm:$0xf]
    %v1706 = vld [vmem:[%s1691 + $0x38] sm:$0xf]
    %v1707 = vld [vmem:[%s1691 + $0x3c] sm:$0xf]
    %s1708 = scalar_lea.vmem %s7, 13
    %v1709 = vld [vmem:[%s1708] sm:$0x1]
    %v1711 = vlaneseq
    %v1712 = vshrl.u32 %v1711, 7
    %v1713 = vsub.s32 0, %v1712
    %v1714 = vrot.slane %v1709, %v1713
    %v1732 = vunpack.c.l.b16 %v1692
    %v1733 = vunpack.c.l.b16 %v1693
    %v1734 = vunpack.c.l.b16 %v1694
    %v1735 = vunpack.c.l.b16 %v1695
    %v1736 = vunpack.c.l.b16 %v1696
    %v1737 = vunpack.c.l.b16 %v1697
    %v1738 = vunpack.c.l.b16 %v1698
    %v1739 = vunpack.c.l.b16 %v1699
    %v1740 = vunpack.c.l.b16 %v1700
    %v1741 = vunpack.c.l.b16 %v1701
    %v1742 = vunpack.c.l.b16 %v1702
    %v1743 = vunpack.c.l.b16 %v1703
    %v1744 = vunpack.c.l.b16 %v1704
    %v1745 = vunpack.c.l.b16 %v1705
    %v1746 = vunpack.c.l.b16 %v1706
    %v1747 = vunpack.c.l.b16 %v1707
    %v1748 = vpack.c.b16 %v1733, %v1732
    %v1749 = vpack.c.b16 %v1735, %v1734
    %v1750 = vpack.c.b16 %v1737, %v1736
    %v1751 = vpack.c.b16 %v1739, %v1738
    %v1752 = vpack.c.b16 %v1741, %v1740
    %v1753 = vpack.c.b16 %v1743, %v1742
    %v1754 = vpack.c.b16 %v1745, %v1744
    %v1755 = vpack.c.b16 %v1747, %v1746
    %1764 = vmatprep.subr.bf16.mxu0 0
    %1765 = vmatpush1.bf16.msra.mxu0 %v1748
    %1766 = vmatprep.subr.bf16.mxu0 0
    %1767 = vmatpush1.bf16.msra.mxu0 %v1749
    %1768 = vmatprep.subr.bf16.mxu0 0
    %1769 = vmatpush1.bf16.msra.mxu0 %v1750
    %1770 = vmatprep.subr.bf16.mxu0 0
    %1771 = vmatpush1.bf16.msra.mxu0 %v1751
    %1772 = vmatprep.subr.bf16.mxu0 0
    %1773 = vmatpush1.bf16.msra.mxu0 %v1752
    %1774 = vmatprep.subr.bf16.mxu0 0
    %1775 = vmatpush1.bf16.msra.mxu0 %v1753
    %1776 = vmatprep.subr.bf16.mxu0 0
    %1777 = vmatpush1.bf16.msra.mxu0 %v1754
    %1778 = vmatprep.subr.bf16.mxu0 0
    %1779 = vmatpush1.bf16.msra.mxu0 %v1755
    %1780 = vmatprep.subr.bf16.mxu0 0
    %1781 = vmatpush1.bf16.msra.mxu0 0
    %1782 = vmatprep.subr.bf16.mxu0 0
    %1783 = vmatpush1.bf16.msra.mxu0 0
    %1784 = vmatprep.subr.bf16.mxu0 0
    %1785 = vmatpush1.bf16.msra.mxu0 0
    %1786 = vmatprep.subr.bf16.mxu0 0
    %1787 = vmatpush1.bf16.msra.mxu0 0
    %1788 = vmatprep.subr.bf16.mxu0 0
    %1789 = vmatpush1.bf16.msra.mxu0 0
    %1790 = vmatprep.subr.bf16.mxu0 0
    %1791 = vmatpush1.bf16.msra.mxu0 0
    %1792 = vmatprep.subr.bf16.mxu0 0
    %1793 = vmatpush1.bf16.msra.mxu0 0
    %1794 = vmatprep.subr.bf16.mxu0 0
    %1795 = vmatpush1.bf16.msra.mxu0 0
    %1796 = vmatprep.mubr.bf16.mxu0 0
    %1797 = vmatmul.mubr.bf16.gmra.mrb[0].mxu0 %v1690
    %v1798 = vpop.f32.mrb[0].mxu0
    %v1799 = vadd.f32 %v1714, %v1798
    %v1800 = vpop.f32.mrb[0].mxu0
    %v1801 = vpop.f32.mrb[0].mxu0
    %v1802 = vpop.f32.mrb[0].mxu0
    %1803 = vdwg.mxu0
    %v1804 = vtanh.pop %v1799
    %v1805 = vpack.c.bf16 %v1804, %v1804
    %1806 = vst [vmem:[#allocation2] sm:$0xff] 0.0
    %v1807 = vld [vmem:[%s5] sm:$0xff]
    %vm1808 = vcmask 7168
    %1809 = vst.msk [vmem:[#allocation2] sm:$0xff] %vm1808, %v1807
    %v1810 = vld [vmem:[#allocation2] sm:$0xff]
    %s1811 = scalar_lea.vmem [#allocation5], 960
    %v1812 = vld [vmem:[%s1811] sm:$0xf]
    %v1813 = vld [vmem:[%s1811 + $0x4] sm:$0xf]
    %v1814 = vld [vmem:[%s1811 + $0x8] sm:$0xf]
    %v1815 = vld [vmem:[%s1811 + $0xc] sm:$0xf]
    %v1816 = vld [vmem:[%s1811 + $0x10] sm:$0xf]
    %v1817 = vld [vmem:[%s1811 + $0x14] sm:$0xf]
    %v1818 = vld [vmem:[%s1811 + $0x18] sm:$0xf]
    %v1819 = vld [vmem:[%s1811 + $0x1c] sm:$0xf]
    %v1820 = vld [vmem:[%s1811 + $0x20] sm:$0xf]
    %v1821 = vld [vmem:[%s1811 + $0x24] sm:$0xf]
    %v1822 = vld [vmem:[%s1811 + $0x28] sm:$0xf]
    %v1823 = vld [vmem:[%s1811 + $0x2c] sm:$0xf]
    %v1824 = vld [vmem:[%s1811 + $0x30] sm:$0xf]
    %v1825 = vld [vmem:[%s1811 + $0x34] sm:$0xf]
    %v1826 = vld [vmem:[%s1811 + $0x38] sm:$0xf]
    %v1827 = vld [vmem:[%s1811 + $0x3c] sm:$0xf]
    %s1828 = scalar_lea.vmem %s7, 14
    %v1829 = vld [vmem:[%s1828] sm:$0x1]
    %s1830 = scalar_lea.vmem [#allocation5], 1024
    %v1831 = vld [vmem:[%s1830] sm:$0xf]
    %v1832 = vld [vmem:[%s1830 + $0x4] sm:$0xf]
    %v1833 = vld [vmem:[%s1830 + $0x8] sm:$0xf]
    %v1834 = vld [vmem:[%s1830 + $0xc] sm:$0xf]
    %v1835 = vld [vmem:[%s1830 + $0x10] sm:$0xf]
    %v1836 = vld [vmem:[%s1830 + $0x14] sm:$0xf]
    %v1837 = vld [vmem:[%s1830 + $0x18] sm:$0xf]
    %v1838 = vld [vmem:[%s1830 + $0x1c] sm:$0xf]
    %v1839 = vld [vmem:[%s1830 + $0x20] sm:$0xf]
    %v1840 = vld [vmem:[%s1830 + $0x24] sm:$0xf]
    %v1841 = vld [vmem:[%s1830 + $0x28] sm:$0xf]
    %v1842 = vld [vmem:[%s1830 + $0x2c] sm:$0xf]
    %v1843 = vld [vmem:[%s1830 + $0x30] sm:$0xf]
    %v1844 = vld [vmem:[%s1830 + $0x34] sm:$0xf]
    %v1845 = vld [vmem:[%s1830 + $0x38] sm:$0xf]
    %v1846 = vld [vmem:[%s1830 + $0x3c] sm:$0xf]
    %s1847 = scalar_lea.vmem %s7, 15
    %v1848 = vld [vmem:[%s1847] sm:$0x1]
    %v1850 = vlaneseq
    %v1851 = vshrl.u32 %v1850, 7
    %v1852 = vsub.s32 0, %v1851
    %v1853 = vrot.slane %v1829, %v1852
    %v1871 = vunpack.c.l.b16 %v1812
    %v1872 = vunpack.c.l.b16 %v1813
    %v1873 = vunpack.c.l.b16 %v1814
    %v1874 = vunpack.c.l.b16 %v1815
    %v1875 = vunpack.c.l.b16 %v1816
    %v1876 = vunpack.c.l.b16 %v1817
    %v1877 = vunpack.c.l.b16 %v1818
    %v1878 = vunpack.c.l.b16 %v1819
    %v1879 = vunpack.c.l.b16 %v1820
    %v1880 = vunpack.c.l.b16 %v1821
    %v1881 = vunpack.c.l.b16 %v1822
    %v1882 = vunpack.c.l.b16 %v1823
    %v1883 = vunpack.c.l.b16 %v1824
    %v1884 = vunpack.c.l.b16 %v1825
    %v1885 = vunpack.c.l.b16 %v1826
    %v1886 = vunpack.c.l.b16 %v1827
    %v1887 = vpack.c.b16 %v1872, %v1871
    %v1888 = vpack.c.b16 %v1874, %v1873
    %v1889 = vpack.c.b16 %v1876, %v1875
    %v1890 = vpack.c.b16 %v1878, %v1877
    %v1891 = vpack.c.b16 %v1880, %v1879
    %v1892 = vpack.c.b16 %v1882, %v1881
    %v1893 = vpack.c.b16 %v1884, %v1883
    %v1894 = vpack.c.b16 %v1886, %v1885
    %1903 = vmatprep.subr.bf16.mxu0 0
    %1904 = vmatpush1.bf16.msra.mxu0 %v1887
    %1905 = vmatprep.subr.bf16.mxu0 0
    %1906 = vmatpush1.bf16.msra.mxu0 %v1888
    %1907 = vmatprep.subr.bf16.mxu0 0
    %1908 = vmatpush1.bf16.msra.mxu0 %v1889
    %1909 = vmatprep.subr.bf16.mxu0 0
    %1910 = vmatpush1.bf16.msra.mxu0 %v1890
    %1911 = vmatprep.subr.bf16.mxu0 0
    %1912 = vmatpush1.bf16.msra.mxu0 %v1891
    %1913 = vmatprep.subr.bf16.mxu0 0
    %1914 = vmatpush1.bf16.msra.mxu0 %v1892
    %1915 = vmatprep.subr.bf16.mxu0 0
    %1916 = vmatpush1.bf16.msra.mxu0 %v1893
    %1917 = vmatprep.subr.bf16.mxu0 0
    %1918 = vmatpush1.bf16.msra.mxu0 %v1894
    %1919 = vmatprep.subr.bf16.mxu0 0
    %1920 = vmatpush1.bf16.msra.mxu0 0
    %1921 = vmatprep.subr.bf16.mxu0 0
    %1922 = vmatpush1.bf16.msra.mxu0 0
    %1923 = vmatprep.subr.bf16.mxu0 0
    %1924 = vmatpush1.bf16.msra.mxu0 0
    %1925 = vmatprep.subr.bf16.mxu0 0
    %1926 = vmatpush1.bf16.msra.mxu0 0
    %1927 = vmatprep.subr.bf16.mxu0 0
    %1928 = vmatpush1.bf16.msra.mxu0 0
    %1929 = vmatprep.subr.bf16.mxu0 0
    %1930 = vmatpush1.bf16.msra.mxu0 0
    %1931 = vmatprep.subr.bf16.mxu0 0
    %1932 = vmatpush1.bf16.msra.mxu0 0
    %1933 = vmatprep.subr.bf16.mxu0 0
    %1934 = vmatpush1.bf16.msra.mxu0 0
    %1935 = vmatprep.mubr.bf16.mxu0 0
    %1936 = vmatmul.mubr.bf16.gmra.mrb[0].mxu0 %v1805
    %v1937 = vpop.f32.mrb[0].mxu0
    %v1938 = vadd.f32 %v1853, %v1937
    %v1939 = vpop.f32.mrb[0].mxu0
    %v1940 = vpop.f32.mrb[0].mxu0
    %v1941 = vpop.f32.mrb[0].mxu0
    %1942 = vdwg.mxu0
    %v1943 = vtanh.pop %v1938
    %v1945 = vlaneseq
    %v1946 = vshrl.u32 %v1945, 7
    %v1947 = vsub.s32 0, %v1946
    %v1948 = vrot.slane %v1848, %v1947
    %v1966 = vunpack.c.l.b16 %v1831
    %v1967 = vunpack.c.l.b16 %v1832
    %v1968 = vunpack.c.l.b16 %v1833
    %v1969 = vunpack.c.l.b16 %v1834
    %v1970 = vunpack.c.l.b16 %v1835
    %v1971 = vunpack.c.l.b16 %v1836
    %v1972 = vunpack.c.l.b16 %v1837
    %v1973 = vunpack.c.l.b16 %v1838
    %v1974 = vunpack.c.l.b16 %v1839
    %v1975 = vunpack.c.l.b16 %v1840
    %v1976 = vunpack.c.l.b16 %v1841
    %v1977 = vunpack.c.l.b16 %v1842
    %v1978 = vunpack.c.l.b16 %v1843
    %v1979 = vunpack.c.l.b16 %v1844
    %v1980 = vunpack.c.l.b16 %v1845
    %v1981 = vunpack.c.l.b16 %v1846
    %v1982 = vpack.c.b16 %v1967, %v1966
    %v1983 = vpack.c.b16 %v1969, %v1968
    %v1984 = vpack.c.b16 %v1971, %v1970
    %v1985 = vpack.c.b16 %v1973, %v1972
    %v1986 = vpack.c.b16 %v1975, %v1974
    %v1987 = vpack.c.b16 %v1977, %v1976
    %v1988 = vpack.c.b16 %v1979, %v1978
    %v1989 = vpack.c.b16 %v1981, %v1980
    %1998 = vmatprep.subr.bf16.mxu0 0
    %1999 = vmatpush1.bf16.msra.mxu0 %v1982
    %2000 = vmatprep.subr.bf16.mxu0 0
    %2001 = vmatpush1.bf16.msra.mxu0 %v1983
    %2002 = vmatprep.subr.bf16.mxu0 0
    %2003 = vmatpush1.bf16.msra.mxu0 %v1984
    %2004 = vmatprep.subr.bf16.mxu0 0
    %2005 = vmatpush1.bf16.msra.mxu0 %v1985
    %2006 = vmatprep.subr.bf16.mxu0 0
    %2007 = vmatpush1.bf16.msra.mxu0 %v1986
    %2008 = vmatprep.subr.bf16.mxu0 0
    %2009 = vmatpush1.bf16.msra.mxu0 %v1987
    %2010 = vmatprep.subr.bf16.mxu0 0
    %2011 = vmatpush1.bf16.msra.mxu0 %v1988
    %2012 = vmatprep.subr.bf16.mxu0 0
    %2013 = vmatpush1.bf16.msra.mxu0 %v1989
    %2014 = vmatprep.subr.bf16.mxu0 0
    %2015 = vmatpush1.bf16.msra.mxu0 0
    %2016 = vmatprep.subr.bf16.mxu0 0
    %2017 = vmatpush1.bf16.msra.mxu0 0
    %2018 = vmatprep.subr.bf16.mxu0 0
    %2019 = vmatpush1.bf16.msra.mxu0 0
    %2020 = vmatprep.subr.bf16.mxu0 0
    %2021 = vmatpush1.bf16.msra.mxu0 0
    %2022 = vmatprep.subr.bf16.mxu0 0
    %2023 = vmatpush1.bf16.msra.mxu0 0
    %2024 = vmatprep.subr.bf16.mxu0 0
    %2025 = vmatpush1.bf16.msra.mxu0 0
    %2026 = vmatprep.subr.bf16.mxu0 0
    %2027 = vmatpush1.bf16.msra.mxu0 0
    %2028 = vmatprep.subr.bf16.mxu0 0
    %2029 = vmatpush1.bf16.msra.mxu0 0
    %2030 = vmatprep.mubr.bf16.mxu0 0
    %2031 = vmatmul.mubr.bf16.gmra.mrb[0].mxu0 %v1805
    %v2032 = vpop.f32.mrb[0].mxu0
    %v2033 = vadd.f32 %v1948, %v2032
    %v2034 = vpop.f32.mrb[0].mxu0
    %v2035 = vpop.f32.mrb[0].mxu0
    %v2036 = vpop.f32.mrb[0].mxu0
    %2037 = vdwg.mxu0
    %v2038 = vtanh.pop %v2033
    %v2039 = vmul.f32 %v2038, 0.25
    %v2040 = vmul.f32 %v2039, 1.442695
    %v2041 = vpow.pop %v2040
    %v2042 = vmul.f32 %v2041, %v1810
    %v2043 = vadd.f32 %v1943, %v2042
    %2044 = vst [vmem:[%s8] sm:$0xff] %v1575
    %2045 = vst [vmem:[%s8 + $0x8] sm:$0xff] %v2043
    // Predicated region
    $region42: #{dynamics_forward.1} parent=1 // pred_check
      _
    $region43: #{dynamics_forward.1} parent=1 // pred_check_branch
      %2047 = sbr.rel (0) target = $region45
    $region44: #{dynamics_forward.1} parent=1 // pred_region
      _
    $region45: #{dynamics_forward.1} parent=1 // pred_fallthru
      _
    // Predicated region
    $region46: #{dynamics_forward.1} parent=1 // pred_check
      _
    $region47: #{dynamics_forward.1} parent=1 // pred_check_branch
      %2049 = sbr.rel (0) target = $region49
    $region48: #{dynamics_forward.1} parent=1 // pred_region
      _
    $region49: #{dynamics_forward.1} parent=1 // pred_fallthru
      _
    %2050 = vsyncpa [#allocation4], 1
    %2051 = vsyncpa [#allocation6], 1

</llo_original>
